<compile_context>
chip_gen: v5e
topology: v5e:2x2
jax: 0.10.0
libtpu: 0.0.40
codegen_flags: <defaults>
</compile_context>

<pallas_src>
import functools

import jax
import jax.numpy as jnp
import numpy as np
from jax import lax
from jax.experimental import pallas as pl
from jax.experimental.pallas import tpu as pltpu


def _softmax(z):
    m = jnp.max(z, axis=-1, keepdims=True)
    e = jnp.exp(z - m)
    return e / jnp.sum(e, axis=-1, keepdims=True)


def _log_softmax(z):
    m = jnp.max(z, axis=-1, keepdims=True)
    zs = z - m
    return zs - jnp.log(jnp.sum(jnp.exp(zs), axis=-1, keepdims=True))


def _vat_kernel(x_ref, d0_ref, w_ref, b_ref, o_ref,
                logits_acc, s_acc, nrm_acc, gram_acc,
                *, ip, epsilon, xi):
    """One grid step of grid = (batch_tile, d_tile).

    Every step accumulates logits, s0 = d0@W, ||d0||^2 and Gram = W^T W over the
    current D tile.  At the last D tile the whole power iteration + final KL runs
    on the tiny resident (tB, K) / (K, K) scratch and writes one lane-dense
    (1, K) output row for this batch tile.
    """
    j = pl.program_id(1)
    n_j = pl.num_programs(1)

    # ---------------- start of the D sweep ----------------
    @pl.when(j == 0)
    def _init():
        logits_acc[...] = jnp.zeros_like(logits_acc)
        s_acc[...] = jnp.zeros_like(s_acc)
        nrm_acc[...] = jnp.zeros_like(nrm_acc)
        gram_acc[...] = jnp.zeros_like(gram_acc)

    # ---------------- per-D-tile accumulation (W/x/d0 touched exactly once) ----
    x = x_ref[...]                                           # (tB, tD) bf16
    d0 = d0_ref[...]                                         # (tB, tD) bf16
    w = w_ref[...]                                           # (tD, K)  bf16
    logits_acc[...] += jnp.dot(x, w, preferred_element_type=jnp.float32)
    s_acc[...] += jnp.dot(d0, w, preferred_element_type=jnp.float32)
    d0f = d0.astype(jnp.float32)
    nrm_acc[...] += jnp.sum(d0f * d0f, axis=-1, keepdims=True)
    # Gram = W^T @ W, contracting the D tile of both operands (K x K f32).
    gram_acc[...] += lax.dot_general(w, w,
                                     dimension_numbers=(((0,), (0,)), ((), ())),
                                     preferred_element_type=jnp.float32)

    # ---------------- finalize: power iterations + KL on resident scratch ------
    @pl.when(j == n_j - 1)
    def _final():
        bias = b_ref[...]                                    # (1, K) f32
        logits = logits_acc[...] + bias
        log_ys = _log_softmax(logits)
        ys = jnp.exp(log_ys)
        gram = gram_acc[...]                                 # (K, K) f32

        sg = s_acc[...]                                      # d0 @ W
        nrm = nrm_acc[...]                                   # ||d0||^2
        # ip is a small static Python int -> unrolled tiny (tB,K)x(K,K) loop.
        for _ in range(ip):
            scale = xi / (jnp.sqrt(jnp.maximum(nrm, 0.0)) + 1e-10)   # (tB, 1)
            adv_logits = logits + scale * sg                 # logits + xi*norm(d)@W
            p_adv = _softmax(adv_logits)
            # d/d(adv_logits) of the batchmean KL, up to the positive factor
            # xi/B that the following L2 normalization removes exactly.
            gl = p_adv - ys                                  # (tB, K)
            sg = jnp.dot(gl, gram, preferred_element_type=jnp.float32)  # (gl@W^T)@W
            nrm = jnp.sum(sg * gl, axis=-1, keepdims=True)   # ||gl @ W^T||^2

        scale = epsilon / (jnp.sqrt(jnp.maximum(nrm, 0.0)) + 1e-10)
        adv_logits = logits + scale * sg                     # logits + eps*norm(d)@W
        log_p_adv = _log_softmax(adv_logits)
        kl = ys * (log_ys - log_p_adv)                       # (tB, K); padded cols == 0
        # One lane-dense row per batch tile; wrapper sums and divides by B.
        o_ref[...] = jnp.sum(kl, axis=0, keepdims=True)


def _vmem_budget_bytes(tile_b, tile_d, k_pad):
    """Derive the scoped-VMEM request from actual tile bytes; cap below v7x's
    64 MiB physical VMEM so the same tiling works on v5e/v6e/v7x."""
    pb = max(tile_b, 16)          # bf16 sublane packing pads tiny batch tiles
    bf16, f32 = 2, 4
    streamed = 2 * (2 * pb * tile_d * bf16) + 2 * tile_d * k_pad * bf16 \
        + 2 * max(8, 1) * k_pad * f32
    scratch = 2 * pb * k_pad * f32 + pb * 128 * f32 + k_pad * k_pad * f32
    out = 2 * max(8, 1) * k_pad * f32
    need = streamed + scratch + out
    return int(min(max(3 * need, 8 * 1024 * 1024), 48 * 1024 * 1024))


def vat_loss_pallas(x_nchw, w, b, d0_nchw, *, ip, epsilon, xi,
                    tile_d=1024, tile_b=None):
    B = x_nchw.shape[0]
    x = x_nchw.reshape(B, -1).astype(jnp.float32)            # (B, D)
    d0 = d0_nchw.reshape(B, -1).astype(jnp.float32)          # (B, D)
    D = x.shape[1]
    K = w.shape[1]

    # ---- lane-dense class axis: pad K up to a multiple of 128 -----------------
    # Padded W columns are zero and padded bias is a large negative *finite*
    # value, so padded classes get probability exactly 0, contribute 0 to the KL
    # sum and 0 to the gradient direction (Gram's padded rows/cols are zero).
    k_pad = max(128, int(np.ceil(K / 128)) * 128)
    if k_pad != K:
        w = jnp.pad(w.astype(jnp.float32), ((0, 0), (0, k_pad - K)))
        b = jnp.concatenate([b.astype(jnp.float32),
                             jnp.full((k_pad - K,), -1e9, dtype=jnp.float32)])
    else:
        w = w.astype(jnp.float32)
        b = b.astype(jnp.float32)

    # ---- D tiling: biggest tile that makes sense (collapses for the demo) -----
    assert tile_d % 128 == 0
    tile_d = min(tile_d, int(np.ceil(D / 128)) * 128)
    n_dt = int(np.ceil(D / tile_d))
    d_padding = n_dt * tile_d - D
    if d_padding:
        # Zero feature padding is exact: adds nothing to logits, d@W, Gram, ||d||^2.
        x = jnp.pad(x, ((0, 0), (0, d_padding)))
        d0 = jnp.pad(d0, ((0, 0), (0, d_padding)))
        w = jnp.pad(w, ((0, d_padding), (0, 0)))

    # ---- batch tiling (demo batch is one tiny tile; see NOTE in header) -------
    if tile_b is None:
        tile_b = B
    assert B % tile_b == 0
    n_bt = B // tile_b

    xb = x.astype(jnp.bfloat16)       # stream big operands as bf16
    db = d0.astype(jnp.bfloat16)
    wb = w.astype(jnp.bfloat16)
    b2 = b.reshape(1, k_pad)

    kernel = functools.partial(_vat_kernel, ip=int(ip),
                               epsilon=float(epsilon), xi=float(xi))

    partial_kl = pl.pallas_call(
        kernel,
        out_shape=jax.ShapeDtypeStruct((n_bt, k_pad), jnp.float32),
        grid_spec=pltpu.PrefetchScalarGridSpec(
            num_scalar_prefetch=0,
            grid=(n_bt, n_dt),
            in_specs=[
                pl.BlockSpec((tile_b, tile_d), lambda bt, j: (bt, j)),   # x
                pl.BlockSpec((tile_b, tile_d), lambda bt, j: (bt, j)),   # d0 noise
                pl.BlockSpec((tile_d, k_pad), lambda bt, j: (j, 0)),     # W
                pl.BlockSpec((1, k_pad), lambda bt, j: (0, 0)),          # bias
            ],
            # One lane-dense (1, 128) row per batch tile: each TensorCore owns its
            # own output window when the batch axis is split across cores.
            out_specs=pl.BlockSpec((1, k_pad), lambda bt, j: (bt, 0)),
            scratch_shapes=[
                pltpu.VMEM((tile_b, k_pad), jnp.float32),   # logits accumulator
                pltpu.VMEM((tile_b, k_pad), jnp.float32),   # s = d0 @ W accumulator
                pltpu.VMEM((tile_b, 1), jnp.float32),       # ||d0||^2 accumulator
                pltpu.VMEM((k_pad, k_pad), jnp.float32),    # Gram = W^T W accumulator
            ],
        ),
        compiler_params=pltpu.CompilerParams(
            dimension_semantics=("parallel", "arbitrary"),
            vmem_limit_bytes=_vmem_budget_bytes(tile_b, tile_d, k_pad),
        ),
    )(xb, db, wb, b2)

    # Padded classes contribute exactly 0, so a full-width sum is exact.
    return jnp.sum(partial_kl) / B


def vat_loss_ref(x_nchw, w, b, d0_nchw, *, ip, epsilon, xi):
    """Pure-JAX reference written in the original module's form, on the same
    bf16-quantized inputs the kernel streams (apples-to-apples comparison)."""
    B = x_nchw.shape[0]
    x = x_nchw.reshape(B, -1).astype(jnp.bfloat16).astype(jnp.float32)
    d = d0_nchw.reshape(B, -1).astype(jnp.bfloat16).astype(jnp.float32)
    w32 = w.astype(jnp.bfloat16).astype(jnp.float32)
    b32 = b.astype(jnp.float32)

    def model(inp):
        return jnp.dot(inp, w32, precision=lax.Precision.HIGHEST) + b32[None, :]

    def normalize(t):
        return t / (jnp.sqrt(jnp.sum(t * t, axis=-1, keepdims=True)) + 1e-10)

    log_ys = jax.nn.log_softmax(model(x), axis=-1)
    ys = jnp.exp(log_ys)
    d = normalize(d)
    for _ in range(ip):
        y_adv = jax.nn.log_softmax(model(x + d * xi), axis=-1)
        p_adv = jnp.exp(y_adv)
        # autograd of batchmean KL(ys || y_adv) wrt d for the linear model
        grad_d = xi * jnp.dot((p_adv - ys) / B, w32.T, precision=lax.Precision.HIGHEST)
        d = normalize(grad_d)
    y_adv = jax.nn.log_softmax(model(x + epsilon * d), axis=-1)
    return jnp.sum(ys * (log_ys - y_adv)) / B


if __name__ == "__main__":
    # VATLoss hyperparameters.  xi=10 (as in the VAT paper's finite-difference
    # power step) keeps the perturbation well above f32 rounding of the logits.
    EPSILON, XI = 1.0, 10.0

    B, C, H, W = 2, 4, 16, 16        # NCHW input, D = 1024
    K = 16                           # classes of the synthetic linear classifier

    key = jax.random.PRNGKey(0)
    kx, kw, kb, kd = jax.random.split(key, 4)

    x = jax.random.normal(kx, (B, C, H, W), dtype=jnp.float32)
    w = jax.random.normal(kw, (C * H * W, K), dtype=jnp.float32) * 0.05
    b = jax.random.normal(kb, (K,), dtype=jnp.float32) * 0.01
    d0 = jax.random.uniform(kd, (B, C, H, W), dtype=jnp.float32) - 0.5  # torch.rand(...)-0.5

    for ip in (1, 2):                # exercise one and multiple power iterations
        loss = jax.block_until_ready(
            vat_loss_pallas(x, w, b, d0, ip=ip, epsilon=EPSILON, xi=XI))
        ref = jax.block_until_ready(
            vat_loss_ref(x, w, b, d0, ip=ip, epsilon=EPSILON, xi=XI))
        assert np.isfinite(float(loss)), (ip, float(loss))
        # tolerance covers f32 accumulation-order / Gram-path rounding differences
        # (both sides see the same bf16-quantized x / d0 / W)
        assert np.allclose(float(loss), float(ref), rtol=2e-2, atol=1e-5), \
            (ip, float(loss), float(ref))

    print("KERNEL_OK")
</pallas_src>

<mosaic_0001>
module attributes {stable_mosaic.version = 11 : i64} {
  func.func @_vat_kernel(%arg0: i32, %arg1: i32, %arg2: memref<2x1024xbf16, #tpu.memory_space<vmem>>, %arg3: memref<2x1024xbf16, #tpu.memory_space<vmem>>, %arg4: memref<1024x128xbf16, #tpu.memory_space<vmem>>, %arg5: memref<1x128xf32, #tpu.memory_space<vmem>>, %arg6: memref<1x128xf32, #tpu.memory_space<vmem>>, %arg7: memref<2x128xf32, #tpu.memory_space<vmem>>, %arg8: memref<2x128xf32, #tpu.memory_space<vmem>>, %arg9: memref<2x1xf32, #tpu.memory_space<vmem>>, %arg10: memref<128x128xf32, #tpu.memory_space<vmem>>) attributes {dimension_semantics = [#tpu.dimension_semantics<parallel>, #tpu.dimension_semantics<arbitrary>], iteration_bounds = array<i64: 1, 1>, scalar_prefetch = 0 : i64, scratch_operands = 4 : i64, tpu.core_type = #tpu.core_type<tc>, window_params = [{transform_indices = @transform_0, window_bounds = array<i64: 2, 1024>}, {transform_indices = @transform_1, window_bounds = array<i64: 2, 1024>}, {transform_indices = @transform_2, window_bounds = array<i64: 1024, 128>}, {pipeline_mode = #tpu.pipeline_mode<synchronous>, transform_indices = @transform_3, window_bounds = array<i64: 1, 128>}, {transform_indices = @transform_4, window_bounds = array<i64: 1, 128>}]} {
    %c0_i32 = arith.constant 0 : i32
    %0 = arith.cmpi eq, %arg1, %c0_i32 : i32
    %1 = arith.extui %0 : i1 to i32
    %c0_i32_0 = arith.constant 0 : i32
    %2 = arith.cmpi ne, %1, %c0_i32_0 : i32
    scf.if %2 {
      %cst_27 = arith.constant 0.000000e+00 : f32
      %28 = vector.broadcast %cst_27 : f32 to vector<2x128xf32>
      %c0_28 = arith.constant 0 : index
      %c0_29 = arith.constant 0 : index
      %29 = vector.load %arg7[%c0_28, %c0_29] : memref<2x128xf32, #tpu.memory_space<vmem>>, vector<2x128xf32>
      tpu.vector_store %arg7[%c0_28, %c0_29], %28 {strides = array<i32>} : memref<2x128xf32, #tpu.memory_space<vmem>>, vector<2x128xf32>,
      %cst_30 = arith.constant 0.000000e+00 : f32
      %30 = vector.broadcast %cst_30 : f32 to vector<2x128xf32>
      %c0_31 = arith.constant 0 : index
      %c0_32 = arith.constant 0 : index
      %31 = vector.load %arg8[%c0_31, %c0_32] : memref<2x128xf32, #tpu.memory_space<vmem>>, vector<2x128xf32>
      tpu.vector_store %arg8[%c0_31, %c0_32], %30 {strides = array<i32>} : memref<2x128xf32, #tpu.memory_space<vmem>>, vector<2x128xf32>,
      %cst_33 = arith.constant 0.000000e+00 : f32
      %32 = vector.broadcast %cst_33 : f32 to vector<2x1xf32>
      %c0_34 = arith.constant 0 : index
      %c0_35 = arith.constant 0 : index
      %33 = vector.load %arg9[%c0_34, %c0_35] : memref<2x1xf32, #tpu.memory_space<vmem>>, vector<2x1xf32>
      tpu.vector_store %arg9[%c0_34, %c0_35], %32 {strides = array<i32>} : memref<2x1xf32, #tpu.memory_space<vmem>>, vector<2x1xf32>,
      %cst_36 = arith.constant 0.000000e+00 : f32
      %34 = vector.broadcast %cst_36 : f32 to vector<128x128xf32>
      %c0_37 = arith.constant 0 : index
      %c0_38 = arith.constant 0 : index
      %35 = vector.load %arg10[%c0_37, %c0_38] : memref<128x128xf32, #tpu.memory_space<vmem>>, vector<128x128xf32>
      tpu.vector_store %arg10[%c0_37, %c0_38], %34 {strides = array<i32>} : memref<128x128xf32, #tpu.memory_space<vmem>>, vector<128x128xf32>,
    } else {
    }
    %c0 = arith.constant 0 : index
    %c0_1 = arith.constant 0 : index
    %3 = vector.load %arg2[%c0, %c0_1] : memref<2x1024xbf16, #tpu.memory_space<vmem>>, vector<2x1024xbf16>
    %c0_2 = arith.constant 0 : index
    %c0_3 = arith.constant 0 : index
    %4 = vector.load %arg3[%c0_2, %c0_3] : memref<2x1024xbf16, #tpu.memory_space<vmem>>, vector<2x1024xbf16>
    %c0_4 = arith.constant 0 : index
    %c0_5 = arith.constant 0 : index
    %5 = vector.load %arg4[%c0_4, %c0_5] : memref<1024x128xbf16, #tpu.memory_space<vmem>>, vector<1024x128xbf16>
    %c0_6 = arith.constant 0 : index
    %c0_7 = arith.constant 0 : index
    %6 = vector.load %arg7[%c0_6, %c0_7] : memref<2x128xf32, #tpu.memory_space<vmem>>, vector<2x128xf32>
    %cst = arith.constant dense<0.000000e+00> : vector<2x128xf32>
    %7 = tpu.matmul %3, %5, %cst {dimension_numbers = #tpu.dot_dimension_numbers<[1], [0], [0], [1], [0, 0, 1, 1], [], []>} : vector<2x1024xbf16>, vector<1024x128xbf16>, vector<2x128xf32> -> vector<2x128xf32>
    %8 = arith.addf %6, %7 : vector<2x128xf32>
    %c0_8 = arith.constant 0 : index
    %c0_9 = arith.constant 0 : index
    %9 = vector.load %arg7[%c0_8, %c0_9] : memref<2x128xf32, #tpu.memory_space<vmem>>, vector<2x128xf32>
    tpu.vector_store %arg7[%c0_8, %c0_9], %8 {strides = array<i32>} : memref<2x128xf32, #tpu.memory_space<vmem>>, vector<2x128xf32>,
    %c0_10 = arith.constant 0 : index
    %c0_11 = arith.constant 0 : index
    %10 = vector.load %arg8[%c0_10, %c0_11] : memref<2x128xf32, #tpu.memory_space<vmem>>, vector<2x128xf32>
    %cst_12 = arith.constant dense<0.000000e+00> : vector<2x128xf32>
    %11 = tpu.matmul %4, %5, %cst_12 {dimension_numbers = #tpu.dot_dimension_numbers<[1], [0], [0], [1], [0, 0, 1, 1], [], []>} : vector<2x1024xbf16>, vector<1024x128xbf16>, vector<2x128xf32> -> vector<2x128xf32>
    %12 = arith.addf %10, %11 : vector<2x128xf32>
    %c0_13 = arith.constant 0 : index
    %c0_14 = arith.constant 0 : index
    %13 = vector.load %arg8[%c0_13, %c0_14] : memref<2x128xf32, #tpu.memory_space<vmem>>, vector<2x128xf32>
    tpu.vector_store %arg8[%c0_13, %c0_14], %12 {strides = array<i32>} : memref<2x128xf32, #tpu.memory_space<vmem>>, vector<2x128xf32>,
    %14 = arith.extf %4 : vector<2x1024xbf16> to vector<2x1024xf32>
    %c0_15 = arith.constant 0 : index
    %c0_16 = arith.constant 0 : index
    %15 = vector.load %arg9[%c0_15, %c0_16] : memref<2x1xf32, #tpu.memory_space<vmem>>, vector<2x1xf32>
    %16 = arith.mulf %14, %14 : vector<2x1024xf32>
    %cst_17 = arith.constant dense<0.000000e+00> : vector<2xf32>
    %17 = vector.multi_reduction <add>, %16, %cst_17 [1] : vector<2x1024xf32> to vector<2xf32>
    %18 = vector.shape_cast %17 : vector<2xf32> to vector<2x1xf32>
    %19 = arith.addf %15, %18 : vector<2x1xf32>
    %c0_18 = arith.constant 0 : index
    %c0_19 = arith.constant 0 : index
    %20 = vector.load %arg9[%c0_18, %c0_19] : memref<2x1xf32, #tpu.memory_space<vmem>>, vector<2x1xf32>
    tpu.vector_store %arg9[%c0_18, %c0_19], %19 {strides = array<i32>} : memref<2x1xf32, #tpu.memory_space<vmem>>, vector<2x1xf32>,
    %c0_20 = arith.constant 0 : index
    %c0_21 = arith.constant 0 : index
    %21 = vector.load %arg10[%c0_20, %c0_21] : memref<128x128xf32, #tpu.memory_space<vmem>>, vector<128x128xf32>
    %cst_22 = arith.constant dense<0.000000e+00> : vector<128x128xf32>
    %22 = tpu.matmul %5, %5, %cst_22 {dimension_numbers = #tpu.dot_dimension_numbers<[0], [0], [1], [1], [0, 1, 1, 1], [], []>} : vector<1024x128xbf16>, vector<1024x128xbf16>, vector<128x128xf32> -> vector<128x128xf32>
    %23 = arith.addf %21, %22 : vector<128x128xf32>
    %c0_23 = arith.constant 0 : index
    %c0_24 = arith.constant 0 : index
    %24 = vector.load %arg10[%c0_23, %c0_24] : memref<128x128xf32, #tpu.memory_space<vmem>>, vector<128x128xf32>
    tpu.vector_store %arg10[%c0_23, %c0_24], %23 {strides = array<i32>} : memref<128x128xf32, #tpu.memory_space<vmem>>, vector<128x128xf32>,
    %c0_i32_25 = arith.constant 0 : i32
    %25 = arith.cmpi eq, %arg1, %c0_i32_25 : i32
    %26 = arith.extui %25 : i1 to i32
    %c0_i32_26 = arith.constant 0 : i32
    %27 = arith.cmpi ne, %26, %c0_i32_26 : i32
    scf.if %27 {
      %c0_27 = arith.constant 0 : index
      %c0_28 = arith.constant 0 : index
      %28 = vector.load %arg5[%c0_27, %c0_28] : memref<1x128xf32, #tpu.memory_space<vmem>>, vector<1x128xf32>
      %c0_29 = arith.constant 0 : index
      %c0_30 = arith.constant 0 : index
      %29 = vector.load %arg7[%c0_29, %c0_30] : memref<2x128xf32, #tpu.memory_space<vmem>>, vector<2x128xf32>
      %30 = vector.broadcast %28 : vector<1x128xf32> to vector<2x128xf32>
      %31 = arith.addf %29, %30 : vector<2x128xf32>
      %cst_31 = arith.constant dense<0xFF800000> : vector<2xf32>
      %32 = vector.multi_reduction <maximumf>, %31, %cst_31 [1] : vector<2x128xf32> to vector<2xf32>
      %33 = vector.shape_cast %32 : vector<2xf32> to vector<2x1xf32>
      %34 = vector.broadcast %33 : vector<2x1xf32> to vector<2x128xf32>
      %35 = arith.subf %31, %34 : vector<2x128xf32>
      %36 = math.exp %35 : vector<2x128xf32>
      %cst_32 = arith.constant dense<0.000000e+00> : vector<2xf32>
      %37 = vector.multi_reduction <add>, %36, %cst_32 [1] : vector<2x128xf32> to vector<2xf32>
      %38 = vector.shape_cast %37 : vector<2xf32> to vector<2x1xf32>
      %39 = math.log %38 : vector<2x1xf32>
      %40 = vector.broadcast %39 : vector<2x1xf32> to vector<2x128xf32>
      %41 = arith.subf %35, %40 : vector<2x128xf32>
      %42 = math.exp %41 : vector<2x128xf32>
      %c0_33 = arith.constant 0 : index
      %c0_34 = arith.constant 0 : index
      %43 = vector.load %arg10[%c0_33, %c0_34] : memref<128x128xf32, #tpu.memory_space<vmem>>, vector<128x128xf32>
      %c0_35 = arith.constant 0 : index
      %c0_36 = arith.constant 0 : index
      %44 = vector.load %arg8[%c0_35, %c0_36] : memref<2x128xf32, #tpu.memory_space<vmem>>, vector<2x128xf32>
      %c0_37 = arith.constant 0 : index
      %c0_38 = arith.constant 0 : index
      %45 = vector.load %arg9[%c0_37, %c0_38] : memref<2x1xf32, #tpu.memory_space<vmem>>, vector<2x1xf32>
      %cst_39 = arith.constant 0.000000e+00 : f32
      %46 = vector.broadcast %cst_39 : f32 to vector<2x1xf32>
      %47 = arith.maximumf %45, %46 : vector<2x1xf32>
      %48 = math.sqrt %47 : vector<2x1xf32>
      %cst_40 = arith.constant 1.000000e-10 : f32
      %49 = vector.broadcast %cst_40 : f32 to vector<2x1xf32>
      %50 = arith.addf %48, %49 : vector<2x1xf32>
      %cst_41 = arith.constant 1.000000e+01 : f32
      %51 = vector.broadcast %cst_41 : f32 to vector<2x1xf32>
      %52 = arith.divf %51, %50 : vector<2x1xf32>
      %53 = vector.broadcast %52 : vector<2x1xf32> to vector<2x128xf32>
      %54 = arith.mulf %53, %44 : vector<2x128xf32>
      %55 = arith.addf %31, %54 : vector<2x128xf32>
      %cst_42 = arith.constant dense<0xFF800000> : vector<2xf32>
      %56 = vector.multi_reduction <maximumf>, %55, %cst_42 [1] : vector<2x128xf32> to vector<2xf32>
      %57 = vector.shape_cast %56 : vector<2xf32> to vector<2x1xf32>
      %58 = vector.broadcast %57 : vector<2x1xf32> to vector<2x128xf32>
      %59 = arith.subf %55, %58 : vector<2x128xf32>
      %60 = math.exp %59 : vector<2x128xf32>
      %cst_43 = arith.constant dense<0.000000e+00> : vector<2xf32>
      %61 = vector.multi_reduction <add>, %60, %cst_43 [1] : vector<2x128xf32> to vector<2xf32>
      %62 = vector.shape_cast %61 : vector<2xf32> to vector<2x1xf32>
      %63 = vector.broadcast %62 : vector<2x1xf32> to vector<2x128xf32>
      %64 = arith.divf %60, %63 : vector<2x128xf32>
      %65 = arith.subf %64, %42 : vector<2x128xf32>
      %cst_44 = arith.constant dense<0.000000e+00> : vector<2x128xf32>
      %66 = tpu.matmul %65, %43, %cst_44 {dimension_numbers = #tpu.dot_dimension_numbers<[1], [0], [0], [1], [0, 0, 1, 1], [], []>} : vector<2x128xf32>, vector<128x128xf32>, vector<2x128xf32> -> vector<2x128xf32>
      %67 = arith.mulf %66, %65 : vector<2x128xf32>
      %cst_45 = arith.constant dense<0.000000e+00> : vector<2xf32>
      %68 = vector.multi_reduction <add>, %67, %cst_45 [1] : vector<2x128xf32> to vector<2xf32>
      %69 = vector.shape_cast %68 : vector<2xf32> to vector<2x1xf32>
      %cst_46 = arith.constant 0.000000e+00 : f32
      %70 = vector.broadcast %cst_46 : f32 to vector<2x1xf32>
      %71 = arith.maximumf %69, %70 : vector<2x1xf32>
      %72 = math.sqrt %71 : vector<2x1xf32>
      %cst_47 = arith.constant 1.000000e-10 : f32
      %73 = vector.broadcast %cst_47 : f32 to vector<2x1xf32>
      %74 = arith.addf %72, %73 : vector<2x1xf32>
      %cst_48 = arith.constant 1.000000e+00 : f32
      %75 = vector.broadcast %cst_48 : f32 to vector<2x1xf32>
      %76 = arith.divf %75, %74 : vector<2x1xf32>
      %77 = vector.broadcast %76 : vector<2x1xf32> to vector<2x128xf32>
      %78 = arith.mulf %77, %66 : vector<2x128xf32>
      %79 = arith.addf %31, %78 : vector<2x128xf32>
      %cst_49 = arith.constant dense<0xFF800000> : vector<2xf32>
      %80 = vector.multi_reduction <maximumf>, %79, %cst_49 [1] : vector<2x128xf32> to vector<2xf32>
      %81 = vector.shape_cast %80 : vector<2xf32> to vector<2x1xf32>
      %82 = vector.broadcast %81 : vector<2x1xf32> to vector<2x128xf32>
      %83 = arith.subf %79, %82 : vector<2x128xf32>
      %84 = math.exp %83 : vector<2x128xf32>
      %cst_50 = arith.constant dense<0.000000e+00> : vector<2xf32>
      %85 = vector.multi_reduction <add>, %84, %cst_50 [1] : vector<2x128xf32> to vector<2xf32>
      %86 = vector.shape_cast %85 : vector<2xf32> to vector<2x1xf32>
      %87 = math.log %86 : vector<2x1xf32>
      %88 = vector.broadcast %87 : vector<2x1xf32> to vector<2x128xf32>
      %89 = arith.subf %83, %88 : vector<2x128xf32>
      %90 = arith.subf %41, %89 : vector<2x128xf32>
      %91 = arith.mulf %42, %90 : vector<2x128xf32>
      %cst_51 = arith.constant dense<0.000000e+00> : vector<128xf32>
      %92 = vector.multi_reduction <add>, %91, %cst_51 [0] : vector<2x128xf32> to vector<128xf32>
      %93 = vector.shape_cast %92 : vector<128xf32> to vector<1x128xf32>
      %c0_52 = arith.constant 0 : index
      %c0_53 = arith.constant 0 : index
      %94 = vector.load %arg6[%c0_52, %c0_53] : memref<1x128xf32, #tpu.memory_space<vmem>>, vector<1x128xf32>
      tpu.vector_store %arg6[%c0_52, %c0_53], %93 {strides = array<i32>} : memref<1x128xf32, #tpu.memory_space<vmem>>, vector<1x128xf32>,
    } else {
    }
    return
  }
  func.func @transform_0(%arg0: i32, %arg1: i32) -> (i32, i32) {
    %c0_i32 = arith.constant 0 : i32
    return %arg0, %arg1 : i32, i32
  }
  func.func @transform_1(%arg0: i32, %arg1: i32) -> (i32, i32) {
    %c0_i32 = arith.constant 0 : i32
    return %arg0, %arg1 : i32, i32
  }
  func.func @transform_2(%arg0: i32, %arg1: i32) -> (i32, i32) {
    %c0_i32 = arith.constant 0 : i32
    %c0_i32_0 = arith.constant 0 : i32
    return %arg1, %c0_i32 : i32, i32
  }
  func.func @transform_3(%arg0: i32, %arg1: i32) -> (i32, i32) {
    %c0_i32 = arith.constant 0 : i32
    %c0_i32_0 = arith.constant 0 : i32
    %c0_i32_1 = arith.constant 0 : i32
    return %c0_i32, %c0_i32_0 : i32, i32
  }
  func.func @transform_4(%arg0: i32, %arg1: i32) -> (i32, i32) {
    %c0_i32 = arith.constant 0 : i32
    %c0_i32_0 = arith.constant 0 : i32
    return %arg0, %c0_i32 : i32, i32
  }
}

</mosaic_0001>

<llo_original>
// kernel: tpu_custom_call.1
$region0: #{tpu_custom_call.1}
  #allocation0 [shape = 'u32[]', space=smem, size = 0x4, offset = 0x4, fixed_abs, tag = 'smem constant byte address 0x4 - core index']
  #allocation1 [shape = 'u32[72,128]{1,0:T(1,128)}', space=vmem, size = 0x9000, scoped, tag = 'internal scratch']
  #allocation2 [shape = 'f32[2,128]{1,0:T(2,128)}', space=vmem, size = 0x400, scoped, tag = 'scratch operand']
  #allocation3 [shape = 'f32[2,128]{1,0:T(2,128)}', space=vmem, size = 0x400, scoped, tag = 'scratch operand']
  #allocation4 [shape = 'f32[2,1]{1,0:T(2,128)}', space=vmem, size = 0x400, scoped, tag = 'scratch operand']
  #allocation5 [shape = 'f32[128,128]{1,0:T(8,128)}', space=vmem, size = 0x10000, scoped, tag = 'scratch operand']
  %s0 = inlined_call_operand.hbm [shape: bf16[2,1024], index: 0, kind: input, shape index: {}]
  %s1 = inlined_call_operand.hbm [shape: bf16[2,1024], index: 1, kind: input, shape index: {}]
  %s2 = inlined_call_operand.hbm [shape: bf16[1024,128], index: 2, kind: input, shape index: {}]
  %s3 = inlined_call_operand.vmem [shape: f32[1,128], index: 3, kind: input, shape index: {}]
  %s4 = inlined_call_operand.hbm [shape: f32[1,128], index: 4, kind: output, shape index: {}]
  %s5 = sld [smem:[#allocation0]]
  $region46: #{tpu_custom_call.1} parent=0
    _
  %s7 = ssub.s32 1, %s5
  %s8 = scalar_select 0, %s7, %s5
  $region1: #{tpu_custom_call.1} parent=0
    #allocation6 [shape = 'u8[4096]{0}', space=vmem, size = 0x1000, scoped, tag = 'input window, operand 0, single buffered']
    #allocation7 [shape = 's32[1]{0}', space=sflag, size = 0x4, scoped, tag = 'scoped memory for tpu_custom_call.1']
    #allocation8 [shape = 's32[1]{0}', space=sflag, size = 0x4, scoped, tag = 'scoped memory for tpu_custom_call.1']
    #allocation9 [shape = 'u8[4096]{0}', space=vmem, size = 0x1000, scoped, tag = 'input window, operand 1, single buffered']
    #allocation10 [shape = 's32[1]{0}', space=sflag, size = 0x4, scoped, tag = 'scoped memory for tpu_custom_call.1']
    #allocation11 [shape = 'u8[262144]{0}', space=vmem, size = 0x40000, scoped, tag = 'input window, operand 2, single buffered']
    #allocation12 [shape = 'u8[512]{0}', space=vmem, size = 0x400, scoped, tag = 'output window, operand 0, single buffered']
    %9 = vsyncpa [#allocation7], 0
    %10 = vsyncpa [#allocation10], 0
    %11 = vsyncpa [#allocation8], 0
    // Predicated region
    $region2: #{tpu_custom_call.1} parent=1 // pred_check
      _
    $region3: #{tpu_custom_call.1} parent=1 // pred_check_branch
      %13 = sbr.rel (0) target = $region5
    $region4: #{tpu_custom_call.1} parent=1 // pred_region
      %15 = vsyncadd [#allocation7], 0
      %s17 = sshll.u32 %s0, 4
      %s18 = int_to_ptr.hbm [resolvable:$true] %s17
      %s19 = sshll.u32 [#allocation6], 4
      %s20 = int_to_ptr.vmem [resolvable:$true] %s19
      %22 = dma.hbm_to_vmem [thread:$0]  %s18, 128, %s20, [#allocation7]
    $region5: #{tpu_custom_call.1} parent=1 // pred_fallthru
      _
    // Predicated region
    $region6: #{tpu_custom_call.1} parent=1 // pred_check
      _
    $region7: #{tpu_custom_call.1} parent=1 // pred_check_branch
      %24 = sbr.rel (0) target = $region9
    $region8: #{tpu_custom_call.1} parent=1 // pred_region
      %26 = vsyncadd [#allocation10], 0
      %s28 = sshll.u32 %s1, 4
      %s29 = int_to_ptr.hbm [resolvable:$true] %s28
      %s30 = sshll.u32 [#allocation9], 4
      %s31 = int_to_ptr.vmem [resolvable:$true] %s30
      %33 = dma.hbm_to_vmem [thread:$0]  %s29, 128, %s31, [#allocation10]
    $region9: #{tpu_custom_call.1} parent=1 // pred_fallthru
      _
    // Predicated region
    $region10: #{tpu_custom_call.1} parent=1 // pred_check
      _
    $region11: #{tpu_custom_call.1} parent=1 // pred_check_branch
      %35 = sbr.rel (0) target = $region13
    $region12: #{tpu_custom_call.1} parent=1 // pred_region
      %37 = vsyncadd [#allocation10], 0
      %s38 = sshll.u32 %s2, 4
      %s39 = int_to_ptr.hbm [resolvable:$true] %s38
      %s40 = sshll.u32 [#allocation11], 4
      %s41 = int_to_ptr.vmem [resolvable:$true] %s40
      %46 = dma.hbm_to_vmem [thread:$0]  %s39, 8192, %s41, [#allocation10], 64, 64, 4
    $region13: #{tpu_custom_call.1} parent=1 // pred_fallthru
      _
    // Predicated region
    $region14: #{tpu_custom_call.1} parent=1 // pred_check
      _
    $region15: #{tpu_custom_call.1} parent=1 // pred_check_branch
      %48 = sbr.rel (0) target = $region17
    $region16: #{tpu_custom_call.1} parent=1 // pred_region
      _
    $region17: #{tpu_custom_call.1} parent=1 // pred_fallthru
      _
    // Predicated region
    $region18: #{tpu_custom_call.1} parent=1 // pred_check
      _
    $region19: #{tpu_custom_call.1} parent=1 // pred_check_branch
      %50 = sbr.rel (0) target = $region21
    $region20: #{tpu_custom_call.1} parent=1 // pred_region
      %52 = dma.done [#allocation7], 128
    $region21: #{tpu_custom_call.1} parent=1 // pred_fallthru
      _
    // Predicated region
    $region22: #{tpu_custom_call.1} parent=1 // pred_check
      _
    $region23: #{tpu_custom_call.1} parent=1 // pred_check_branch
      %54 = sbr.rel (0) target = $region25
    $region24: #{tpu_custom_call.1} parent=1 // pred_region
      %56 = dma.done [#allocation10], 128
    $region25: #{tpu_custom_call.1} parent=1 // pred_fallthru
      _
    // Predicated region
    $region26: #{tpu_custom_call.1} parent=1 // pred_check
      _
    $region27: #{tpu_custom_call.1} parent=1 // pred_check_branch
      %58 = sbr.rel (0) target = $region29
    $region28: #{tpu_custom_call.1} parent=1 // pred_region
      %60 = dma.done [#allocation10], 8192
    $region29: #{tpu_custom_call.1} parent=1 // pred_fallthru
      _
    %p61 = scmp.eq.s32.totalorder 0, 0
    // Predicated region
    $region30: #{tpu_custom_call.1} parent=1 // pred_check
      %p62 = pneg %p61
    $region31: #{tpu_custom_call.1} parent=1 // pred_check_branch
      %64 = sbr.rel (%p62) target = $region33
    $region32: #{tpu_custom_call.1} parent=1 // pred_region
      %65 = vst [vmem:[#allocation2] sm:$0x3] 0.0
      %66 = vst [vmem:[#allocation3] sm:$0x3] 0.0
      %vm67 = vcmask 1024
      %68 = vst.msk [vmem:[#allocation4] sm:$0x3] %vm67, 0.0
      %69 = vst [vmem:[#allocation5] sm:$0xff] 0.0
      %70 = vst [vmem:[#allocation5 + $0x8] sm:$0xff] 0.0
      %71 = vst [vmem:[#allocation5 + $0x10] sm:$0xff] 0.0
      %72 = vst [vmem:[#allocation5 + $0x18] sm:$0xff] 0.0
      %73 = vst [vmem:[#allocation5 + $0x20] sm:$0xff] 0.0
      %74 = vst [vmem:[#allocation5 + $0x28] sm:$0xff] 0.0
      %75 = vst [vmem:[#allocation5 + $0x30] sm:$0xff] 0.0
      %76 = vst [vmem:[#allocation5 + $0x38] sm:$0xff] 0.0
      %77 = vst [vmem:[#allocation5 + $0x40] sm:$0xff] 0.0
      %78 = vst [vmem:[#allocation5 + $0x48] sm:$0xff] 0.0
      %79 = vst [vmem:[#allocation5 + $0x50] sm:$0xff] 0.0
      %80 = vst [vmem:[#allocation5 + $0x58] sm:$0xff] 0.0
      %81 = vst [vmem:[#allocation5 + $0x60] sm:$0xff] 0.0
      %82 = vst [vmem:[#allocation5 + $0x68] sm:$0xff] 0.0
      %83 = vst [vmem:[#allocation5 + $0x70] sm:$0xff] 0.0
      %84 = vst [vmem:[#allocation5 + $0x78] sm:$0xff] 0.0
    $region33: #{tpu_custom_call.1} parent=1 // pred_fallthru
      _
    %v85 = vld [vmem:[#allocation6] sm:$0xff]
    %v86 = vld [vmem:[#allocation9] sm:$0xff]
    %v87 = vld [vmem:[#allocation11] sm:$0xf]
    %v88 = vld [vmem:[#allocation11 + $0x4] sm:$0xf]
    %v89 = vld [vmem:[#allocation11 + $0x8] sm:$0xf]
    %v90 = vld [vmem:[#allocation11 + $0xc] sm:$0xf]
    %v91 = vld [vmem:[#allocation11 + $0x10] sm:$0xf]
    %v92 = vld [vmem:[#allocation11 + $0x14] sm:$0xf]
    %v93 = vld [vmem:[#allocation11 + $0x18] sm:$0xf]
    %v94 = vld [vmem:[#allocation11 + $0x1c] sm:$0xf]
    %v95 = vld [vmem:[#allocation11 + $0x20] sm:$0xf]
    %v96 = vld [vmem:[#allocation11 + $0x24] sm:$0xf]
    %v97 = vld [vmem:[#allocation11 + $0x28] sm:$0xf]
    %v98 = vld [vmem:[#allocation11 + $0x2c] sm:$0xf]
    %v99 = vld [vmem:[#allocation11 + $0x30] sm:$0xf]
    %v100 = vld [vmem:[#allocation11 + $0x34] sm:$0xf]
    %v101 = vld [vmem:[#allocation11 + $0x38] sm:$0xf]
    %v102 = vld [vmem:[#allocation11 + $0x3c] sm:$0xf]
    %v103 = vld [vmem:[#allocation11 + $0x40] sm:$0xf]
    %v104 = vld [vmem:[#allocation11 + $0x44] sm:$0xf]
    %v105 = vld [vmem:[#allocation11 + $0x48] sm:$0xf]
    %v106 = vld [vmem:[#allocation11 + $0x4c] sm:$0xf]
    %v107 = vld [vmem:[#allocation11 + $0x50] sm:$0xf]
    %v108 = vld [vmem:[#allocation11 + $0x54] sm:$0xf]
    %v109 = vld [vmem:[#allocation11 + $0x58] sm:$0xf]
    %v110 = vld [vmem:[#allocation11 + $0x5c] sm:$0xf]
    %v111 = vld [vmem:[#allocation11 + $0x60] sm:$0xf]
    %v112 = vld [vmem:[#allocation11 + $0x64] sm:$0xf]
    %v113 = vld [vmem:[#allocation11 + $0x68] sm:$0xf]
    %v114 = vld [vmem:[#allocation11 + $0x6c] sm:$0xf]
    %v115 = vld [vmem:[#allocation11 + $0x70] sm:$0xf]
    %v116 = vld [vmem:[#allocation11 + $0x74] sm:$0xf]
    %v117 = vld [vmem:[#allocation11 + $0x78] sm:$0xf]
    %v118 = vld [vmem:[#allocation11 + $0x7c] sm:$0xf]
    %v119 = vld [vmem:[#allocation11 + $0x80] sm:$0xf]
    %v120 = vld [vmem:[#allocation11 + $0x84] sm:$0xf]
    %v121 = vld [vmem:[#allocation11 + $0x88] sm:$0xf]
    %v122 = vld [vmem:[#allocation11 + $0x8c] sm:$0xf]
    %v123 = vld [vmem:[#allocation11 + $0x90] sm:$0xf]
    %v124 = vld [vmem:[#allocation11 + $0x94] sm:$0xf]
    %v125 = vld [vmem:[#allocation11 + $0x98] sm:$0xf]
    %v126 = vld [vmem:[#allocation11 + $0x9c] sm:$0xf]
    %v127 = vld [vmem:[#allocation11 + $0xa0] sm:$0xf]
    %v128 = vld [vmem:[#allocation11 + $0xa4] sm:$0xf]
    %v129 = vld [vmem:[#allocation11 + $0xa8] sm:$0xf]
    %v130 = vld [vmem:[#allocation11 + $0xac] sm:$0xf]
    %v131 = vld [vmem:[#allocation11 + $0xb0] sm:$0xf]
    %v132 = vld [vmem:[#allocation11 + $0xb4] sm:$0xf]
    %v133 = vld [vmem:[#allocation11 + $0xb8] sm:$0xf]
    %v134 = vld [vmem:[#allocation11 + $0xbc] sm:$0xf]
    %v135 = vld [vmem:[#allocation11 + $0xc0] sm:$0xf]
    %v136 = vld [vmem:[#allocation11 + $0xc4] sm:$0xf]
    %v137 = vld [vmem:[#allocation11 + $0xc8] sm:$0xf]
    %v138 = vld [vmem:[#allocation11 + $0xcc] sm:$0xf]
    %v139 = vld [vmem:[#allocation11 + $0xd0] sm:$0xf]
    %v140 = vld [vmem:[#allocation11 + $0xd4] sm:$0xf]
    %v141 = vld [vmem:[#allocation11 + $0xd8] sm:$0xf]
    %v142 = vld [vmem:[#allocation11 + $0xdc] sm:$0xf]
    %v143 = vld [vmem:[#allocation11 + $0xe0] sm:$0xf]
    %v144 = vld [vmem:[#allocation11 + $0xe4] sm:$0xf]
    %v145 = vld [vmem:[#allocation11 + $0xe8] sm:$0xf]
    %v146 = vld [vmem:[#allocation11 + $0xec] sm:$0xf]
    %v147 = vld [vmem:[#allocation11 + $0xf0] sm:$0xf]
    %v148 = vld [vmem:[#allocation11 + $0xf4] sm:$0xf]
    %v149 = vld [vmem:[#allocation11 + $0xf8] sm:$0xf]
    %v150 = vld [vmem:[#allocation11 + $0xfc] sm:$0xf]
    %v151 = vld [vmem:[#allocation11 + $0x100] sm:$0xf]
    %v152 = vld [vmem:[#allocation11 + $0x104] sm:$0xf]
    %v153 = vld [vmem:[#allocation11 + $0x108] sm:$0xf]
    %v154 = vld [vmem:[#allocation11 + $0x10c] sm:$0xf]
    %v155 = vld [vmem:[#allocation11 + $0x110] sm:$0xf]
    %v156 = vld [vmem:[#allocation11 + $0x114] sm:$0xf]
    %v157 = vld [vmem:[#allocation11 + $0x118] sm:$0xf]
    %v158 = vld [vmem:[#allocation11 + $0x11c] sm:$0xf]
    %v159 = vld [vmem:[#allocation11 + $0x120] sm:$0xf]
    %v160 = vld [vmem:[#allocation11 + $0x124] sm:$0xf]
    %v161 = vld [vmem:[#allocation11 + $0x128] sm:$0xf]
    %v162 = vld [vmem:[#allocation11 + $0x12c] sm:$0xf]
    %v163 = vld [vmem:[#allocation11 + $0x130] sm:$0xf]
    %v164 = vld [vmem:[#allocation11 + $0x134] sm:$0xf]
    %v165 = vld [vmem:[#allocation11 + $0x138] sm:$0xf]
    %v166 = vld [vmem:[#allocation11 + $0x13c] sm:$0xf]
    %v167 = vld [vmem:[#allocation11 + $0x140] sm:$0xf]
    %v168 = vld [vmem:[#allocation11 + $0x144] sm:$0xf]
    %v169 = vld [vmem:[#allocation11 + $0x148] sm:$0xf]
    %v170 = vld [vmem:[#allocation11 + $0x14c] sm:$0xf]
    %v171 = vld [vmem:[#allocation11 + $0x150] sm:$0xf]
    %v172 = vld [vmem:[#allocation11 + $0x154] sm:$0xf]
    %v173 = vld [vmem:[#allocation11 + $0x158] sm:$0xf]
    %v174 = vld [vmem:[#allocation11 + $0x15c] sm:$0xf]
    %v175 = vld [vmem:[#allocation11 + $0x160] sm:$0xf]
    %v176 = vld [vmem:[#allocation11 + $0x164] sm:$0xf]
    %v177 = vld [vmem:[#allocation11 + $0x168] sm:$0xf]
    %v178 = vld [vmem:[#allocation11 + $0x16c] sm:$0xf]
    %v179 = vld [vmem:[#allocation11 + $0x170] sm:$0xf]
    %v180 = vld [vmem:[#allocation11 + $0x174] sm:$0xf]
    %v181 = vld [vmem:[#allocation11 + $0x178] sm:$0xf]
    %v182 = vld [vmem:[#allocation11 + $0x17c] sm:$0xf]
    %v183 = vld [vmem:[#allocation11 + $0x180] sm:$0xf]
    %v184 = vld [vmem:[#allocation11 + $0x184] sm:$0xf]
    %v185 = vld [vmem:[#allocation11 + $0x188] sm:$0xf]
    %v186 = vld [vmem:[#allocation11 + $0x18c] sm:$0xf]
    %v187 = vld [vmem:[#allocation11 + $0x190] sm:$0xf]
    %v188 = vld [vmem:[#allocation11 + $0x194] sm:$0xf]
    %v189 = vld [vmem:[#allocation11 + $0x198] sm:$0xf]
    %v190 = vld [vmem:[#allocation11 + $0x19c] sm:$0xf]
    %v191 = vld [vmem:[#allocation11 + $0x1a0] sm:$0xf]
    %v192 = vld [vmem:[#allocation11 + $0x1a4] sm:$0xf]
    %v193 = vld [vmem:[#allocation11 + $0x1a8] sm:$0xf]
    %v194 = vld [vmem:[#allocation11 + $0x1ac] sm:$0xf]
    %v195 = vld [vmem:[#allocation11 + $0x1b0] sm:$0xf]
    %v196 = vld [vmem:[#allocation11 + $0x1b4] sm:$0xf]
    %v197 = vld [vmem:[#allocation11 + $0x1b8] sm:$0xf]
    %v198 = vld [vmem:[#allocation11 + $0x1bc] sm:$0xf]
    %v199 = vld [vmem:[#allocation11 + $0x1c0] sm:$0xf]
    %v200 = vld [vmem:[#allocation11 + $0x1c4] sm:$0xf]
    %v201 = vld [vmem:[#allocation11 + $0x1c8] sm:$0xf]
    %v202 = vld [vmem:[#allocation11 + $0x1cc] sm:$0xf]
    %v203 = vld [vmem:[#allocation11 + $0x1d0] sm:$0xf]
    %v204 = vld [vmem:[#allocation11 + $0x1d4] sm:$0xf]
    %v205 = vld [vmem:[#allocation11 + $0x1d8] sm:$0xf]
    %v206 = vld [vmem:[#allocation11 + $0x1dc] sm:$0xf]
    %v207 = vld [vmem:[#allocation11 + $0x1e0] sm:$0xf]
    %v208 = vld [vmem:[#allocation11 + $0x1e4] sm:$0xf]
    %v209 = vld [vmem:[#allocation11 + $0x1e8] sm:$0xf]
    %v210 = vld [vmem:[#allocation11 + $0x1ec] sm:$0xf]
    %v211 = vld [vmem:[#allocation11 + $0x1f0] sm:$0xf]
    %v212 = vld [vmem:[#allocation11 + $0x1f4] sm:$0xf]
    %v213 = vld [vmem:[#allocation11 + $0x1f8] sm:$0xf]
    %v214 = vld [vmem:[#allocation11 + $0x1fc] sm:$0xf]
    %v215 = vld [vmem:[#allocation2] sm:$0x3]
    %217 = vst [vmem:[#allocation1] ss:$9 sm:$0xff] %v85
    %v218 = vld [vmem:[#allocation1] sm:$0xff]
    %v219 = vld [vmem:[#allocation1 + $0x9] sm:$0xff]
    %v220 = vld [vmem:[#allocation1 + $0x12] sm:$0xff]
    %v221 = vld [vmem:[#allocation1 + $0x1b] sm:$0xff]
    %v222 = vld [vmem:[#allocation1 + $0x24] sm:$0xff]
    %v223 = vld [vmem:[#allocation1 + $0x2d] sm:$0xff]
    %v224 = vld [vmem:[#allocation1 + $0x36] sm:$0xff]
    %v225 = vld [vmem:[#allocation1 + $0x3f] sm:$0xff]
    %v362 = vunpack.c.l.b16 %v87
    %v363 = vunpack.c.l.b16 %v88
    %v364 = vunpack.c.l.b16 %v89
    %v365 = vunpack.c.l.b16 %v90
    %v366 = vunpack.c.l.b16 %v91
    %v367 = vunpack.c.l.b16 %v92
    %v368 = vunpack.c.l.b16 %v93
    %v369 = vunpack.c.l.b16 %v94
    %v370 = vunpack.c.l.b16 %v95
    %v371 = vunpack.c.l.b16 %v96
    %v372 = vunpack.c.l.b16 %v97
    %v373 = vunpack.c.l.b16 %v98
    %v374 = vunpack.c.l.b16 %v99
    %v375 = vunpack.c.l.b16 %v100
    %v376 = vunpack.c.l.b16 %v101
    %v377 = vunpack.c.l.b16 %v102
    %v378 = vunpack.c.l.b16 %v103
    %v379 = vunpack.c.l.b16 %v104
    %v380 = vunpack.c.l.b16 %v105
    %v381 = vunpack.c.l.b16 %v106
    %v382 = vunpack.c.l.b16 %v107
    %v383 = vunpack.c.l.b16 %v108
    %v384 = vunpack.c.l.b16 %v109
    %v385 = vunpack.c.l.b16 %v110
    %v386 = vunpack.c.l.b16 %v111
    %v387 = vunpack.c.l.b16 %v112
    %v388 = vunpack.c.l.b16 %v113
    %v389 = vunpack.c.l.b16 %v114
    %v390 = vunpack.c.l.b16 %v115
    %v391 = vunpack.c.l.b16 %v116
    %v392 = vunpack.c.l.b16 %v117
    %v393 = vunpack.c.l.b16 %v118
    %v394 = vunpack.c.l.b16 %v119
    %v395 = vunpack.c.l.b16 %v120
    %v396 = vunpack.c.l.b16 %v121
    %v397 = vunpack.c.l.b16 %v122
    %v398 = vunpack.c.l.b16 %v123
    %v399 = vunpack.c.l.b16 %v124
    %v400 = vunpack.c.l.b16 %v125
    %v401 = vunpack.c.l.b16 %v126
    %v402 = vunpack.c.l.b16 %v127
    %v403 = vunpack.c.l.b16 %v128
    %v404 = vunpack.c.l.b16 %v129
    %v405 = vunpack.c.l.b16 %v130
    %v406 = vunpack.c.l.b16 %v131
    %v407 = vunpack.c.l.b16 %v132
    %v408 = vunpack.c.l.b16 %v133
    %v409 = vunpack.c.l.b16 %v134
    %v410 = vunpack.c.l.b16 %v135
    %v411 = vunpack.c.l.b16 %v136
    %v412 = vunpack.c.l.b16 %v137
    %v413 = vunpack.c.l.b16 %v138
    %v414 = vunpack.c.l.b16 %v139
    %v415 = vunpack.c.l.b16 %v140
    %v416 = vunpack.c.l.b16 %v141
    %v417 = vunpack.c.l.b16 %v142
    %v418 = vunpack.c.l.b16 %v143
    %v419 = vunpack.c.l.b16 %v144
    %v420 = vunpack.c.l.b16 %v145
    %v421 = vunpack.c.l.b16 %v146
    %v422 = vunpack.c.l.b16 %v147
    %v423 = vunpack.c.l.b16 %v148
    %v424 = vunpack.c.l.b16 %v149
    %v425 = vunpack.c.l.b16 %v150
    %v426 = vunpack.c.l.b16 %v151
    %v427 = vunpack.c.l.b16 %v152
    %v428 = vunpack.c.l.b16 %v153
    %v429 = vunpack.c.l.b16 %v154
    %v430 = vunpack.c.l.b16 %v155
    %v431 = vunpack.c.l.b16 %v156
    %v432 = vunpack.c.l.b16 %v157
    %v433 = vunpack.c.l.b16 %v158
    %v434 = vunpack.c.l.b16 %v159
    %v435 = vunpack.c.l.b16 %v160
    %v436 = vunpack.c.l.b16 %v161
    %v437 = vunpack.c.l.b16 %v162
    %v438 = vunpack.c.l.b16 %v163
    %v439 = vunpack.c.l.b16 %v164
    %v440 = vunpack.c.l.b16 %v165
    %v441 = vunpack.c.l.b16 %v166
    %v442 = vunpack.c.l.b16 %v167
    %v443 = vunpack.c.l.b16 %v168
    %v444 = vunpack.c.l.b16 %v169
    %v445 = vunpack.c.l.b16 %v170
    %v446 = vunpack.c.l.b16 %v171
    %v447 = vunpack.c.l.b16 %v172
    %v448 = vunpack.c.l.b16 %v173
    %v449 = vunpack.c.l.b16 %v174
    %v450 = vunpack.c.l.b16 %v175
    %v451 = vunpack.c.l.b16 %v176
    %v452 = vunpack.c.l.b16 %v177
    %v453 = vunpack.c.l.b16 %v178
    %v454 = vunpack.c.l.b16 %v179
    %v455 = vunpack.c.l.b16 %v180
    %v456 = vunpack.c.l.b16 %v181
    %v457 = vunpack.c.l.b16 %v182
    %v458 = vunpack.c.l.b16 %v183
    %v459 = vunpack.c.l.b16 %v184
    %v460 = vunpack.c.l.b16 %v185
    %v461 = vunpack.c.l.b16 %v186
    %v462 = vunpack.c.l.b16 %v187
    %v463 = vunpack.c.l.b16 %v188
    %v464 = vunpack.c.l.b16 %v189
    %v465 = vunpack.c.l.b16 %v190
    %v466 = vunpack.c.l.b16 %v191
    %v467 = vunpack.c.l.b16 %v192
    %v468 = vunpack.c.l.b16 %v193
    %v469 = vunpack.c.l.b16 %v194
    %v470 = vunpack.c.l.b16 %v195
    %v471 = vunpack.c.l.b16 %v196
    %v472 = vunpack.c.l.b16 %v197
    %v473 = vunpack.c.l.b16 %v198
    %v474 = vunpack.c.l.b16 %v199
    %v475 = vunpack.c.l.b16 %v200
    %v476 = vunpack.c.l.b16 %v201
    %v477 = vunpack.c.l.b16 %v202
    %v478 = vunpack.c.l.b16 %v203
    %v479 = vunpack.c.l.b16 %v204
    %v480 = vunpack.c.l.b16 %v205
    %v481 = vunpack.c.l.b16 %v206
    %v482 = vunpack.c.l.b16 %v207
    %v483 = vunpack.c.l.b16 %v208
    %v484 = vunpack.c.l.b16 %v209
    %v485 = vunpack.c.l.b16 %v210
    %v486 = vunpack.c.l.b16 %v211
    %v487 = vunpack.c.l.b16 %v212
    %v488 = vunpack.c.l.b16 %v213
    %v489 = vunpack.c.l.b16 %v214
    %v490 = vpack.c.b16 %v363, %v362
    %v491 = vpack.c.b16 %v365, %v364
    %v492 = vpack.c.b16 %v367, %v366
    %v493 = vpack.c.b16 %v369, %v368
    %v494 = vpack.c.b16 %v371, %v370
    %v495 = vpack.c.b16 %v373, %v372
    %v496 = vpack.c.b16 %v375, %v374
    %v497 = vpack.c.b16 %v377, %v376
    %v498 = vpack.c.b16 %v379, %v378
    %v499 = vpack.c.b16 %v381, %v380
    %v500 = vpack.c.b16 %v383, %v382
    %v501 = vpack.c.b16 %v385, %v384
    %v502 = vpack.c.b16 %v387, %v386
    %v503 = vpack.c.b16 %v389, %v388
    %v504 = vpack.c.b16 %v391, %v390
    %v505 = vpack.c.b16 %v393, %v392
    %v506 = vpack.c.b16 %v395, %v394
    %v507 = vpack.c.b16 %v397, %v396
    %v508 = vpack.c.b16 %v399, %v398
    %v509 = vpack.c.b16 %v401, %v400
    %v510 = vpack.c.b16 %v403, %v402
    %v511 = vpack.c.b16 %v405, %v404
    %v512 = vpack.c.b16 %v407, %v406
    %v513 = vpack.c.b16 %v409, %v408
    %v514 = vpack.c.b16 %v411, %v410
    %v515 = vpack.c.b16 %v413, %v412
    %v516 = vpack.c.b16 %v415, %v414
    %v517 = vpack.c.b16 %v417, %v416
    %v518 = vpack.c.b16 %v419, %v418
    %v519 = vpack.c.b16 %v421, %v420
    %v520 = vpack.c.b16 %v423, %v422
    %v521 = vpack.c.b16 %v425, %v424
    %v522 = vpack.c.b16 %v427, %v426
    %v523 = vpack.c.b16 %v429, %v428
    %v524 = vpack.c.b16 %v431, %v430
    %v525 = vpack.c.b16 %v433, %v432
    %v526 = vpack.c.b16 %v435, %v434
    %v527 = vpack.c.b16 %v437, %v436
    %v528 = vpack.c.b16 %v439, %v438
    %v529 = vpack.c.b16 %v441, %v440
    %v530 = vpack.c.b16 %v443, %v442
    %v531 = vpack.c.b16 %v445, %v444
    %v532 = vpack.c.b16 %v447, %v446
    %v533 = vpack.c.b16 %v449, %v448
    %v534 = vpack.c.b16 %v451, %v450
    %v535 = vpack.c.b16 %v453, %v452
    %v536 = vpack.c.b16 %v455, %v454
    %v537 = vpack.c.b16 %v457, %v456
    %v538 = vpack.c.b16 %v459, %v458
    %v539 = vpack.c.b16 %v461, %v460
    %v540 = vpack.c.b16 %v463, %v462
    %v541 = vpack.c.b16 %v465, %v464
    %v542 = vpack.c.b16 %v467, %v466
    %v543 = vpack.c.b16 %v469, %v468
    %v544 = vpack.c.b16 %v471, %v470
    %v545 = vpack.c.b16 %v473, %v472
    %v546 = vpack.c.b16 %v475, %v474
    %v547 = vpack.c.b16 %v477, %v476
    %v548 = vpack.c.b16 %v479, %v478
    %v549 = vpack.c.b16 %v481, %v480
    %v550 = vpack.c.b16 %v483, %v482
    %v551 = vpack.c.b16 %v485, %v484
    %v552 = vpack.c.b16 %v487, %v486
    %v553 = vpack.c.b16 %v489, %v488
    %618 = vmatpush.bf16.msra.mxu0 %v497
    %619 = vmatpush.bf16.msra.mxu0 %v496
    %620 = vmatpush.bf16.msra.mxu0 %v495
    %621 = vmatpush.bf16.msra.mxu0 %v494
    %622 = vmatpush.bf16.msra.mxu0 %v493
    %623 = vmatpush.bf16.msra.mxu0 %v492
    %624 = vmatpush.bf16.msra.mxu0 %v491
    %625 = vmatpush.bf16.msra.mxu0 %v490
    %626 = vmatmul.bf16.gmra.mxu0 %v218
    %v627 = vpop.f32.mrf.mxu0
    %v628 = vadd.f32 0.0, %v627
    %v629 = vpop.f32.mrf.mxu0
    %630 = vdwg.mxu0
    %631 = vmatpush.bf16.msra.mxu0 %v505
    %632 = vmatpush.bf16.msra.mxu0 %v504
    %633 = vmatpush.bf16.msra.mxu0 %v503
    %634 = vmatpush.bf16.msra.mxu0 %v502
    %635 = vmatpush.bf16.msra.mxu0 %v501
    %636 = vmatpush.bf16.msra.mxu0 %v500
    %637 = vmatpush.bf16.msra.mxu0 %v499
    %638 = vmatpush.bf16.msra.mxu0 %v498
    %639 = vmatmul.bf16.gmra.mxu0 %v219
    %v640 = vpop.f32.mrf.mxu0
    %v641 = vadd.f32 %v628, %v640
    %v642 = vpop.f32.mrf.mxu0
    %643 = vdwg.mxu0
    %644 = vmatpush.bf16.msra.mxu0 %v513
    %645 = vmatpush.bf16.msra.mxu0 %v512
    %646 = vmatpush.bf16.msra.mxu0 %v511
    %647 = vmatpush.bf16.msra.mxu0 %v510
    %648 = vmatpush.bf16.msra.mxu0 %v509
    %649 = vmatpush.bf16.msra.mxu0 %v508
    %650 = vmatpush.bf16.msra.mxu0 %v507
    %651 = vmatpush.bf16.msra.mxu0 %v506
    %652 = vmatmul.bf16.gmra.mxu0 %v220
    %v653 = vpop.f32.mrf.mxu0
    %v654 = vadd.f32 %v641, %v653
    %v655 = vpop.f32.mrf.mxu0
    %656 = vdwg.mxu0
    %657 = vmatpush.bf16.msra.mxu0 %v521
    %658 = vmatpush.bf16.msra.mxu0 %v520
    %659 = vmatpush.bf16.msra.mxu0 %v519
    %660 = vmatpush.bf16.msra.mxu0 %v518
    %661 = vmatpush.bf16.msra.mxu0 %v517
    %662 = vmatpush.bf16.msra.mxu0 %v516
    %663 = vmatpush.bf16.msra.mxu0 %v515
    %664 = vmatpush.bf16.msra.mxu0 %v514
    %665 = vmatmul.bf16.gmra.mxu0 %v221
    %v666 = vpop.f32.mrf.mxu0
    %v667 = vadd.f32 %v654, %v666
    %v668 = vpop.f32.mrf.mxu0
    %669 = vdwg.mxu0
    %670 = vmatpush.bf16.msra.mxu0 %v529
    %671 = vmatpush.bf16.msra.mxu0 %v528
    %672 = vmatpush.bf16.msra.mxu0 %v527
    %673 = vmatpush.bf16.msra.mxu0 %v526
    %674 = vmatpush.bf16.msra.mxu0 %v525
    %675 = vmatpush.bf16.msra.mxu0 %v524
    %676 = vmatpush.bf16.msra.mxu0 %v523
    %677 = vmatpush.bf16.msra.mxu0 %v522
    %678 = vmatmul.bf16.gmra.mxu0 %v222
    %v679 = vpop.f32.mrf.mxu0
    %v680 = vadd.f32 %v667, %v679
    %v681 = vpop.f32.mrf.mxu0
    %682 = vdwg.mxu0
    %683 = vmatpush.bf16.msra.mxu0 %v537
    %684 = vmatpush.bf16.msra.mxu0 %v536
    %685 = vmatpush.bf16.msra.mxu0 %v535
    %686 = vmatpush.bf16.msra.mxu0 %v534
    %687 = vmatpush.bf16.msra.mxu0 %v533
    %688 = vmatpush.bf16.msra.mxu0 %v532
    %689 = vmatpush.bf16.msra.mxu0 %v531
    %690 = vmatpush.bf16.msra.mxu0 %v530
    %691 = vmatmul.bf16.gmra.mxu0 %v223
    %v692 = vpop.f32.mrf.mxu0
    %v693 = vadd.f32 %v680, %v692
    %v694 = vpop.f32.mrf.mxu0
    %695 = vdwg.mxu0
    %696 = vmatpush.bf16.msra.mxu0 %v545
    %697 = vmatpush.bf16.msra.mxu0 %v544
    %698 = vmatpush.bf16.msra.mxu0 %v543
    %699 = vmatpush.bf16.msra.mxu0 %v542
    %700 = vmatpush.bf16.msra.mxu0 %v541
    %701 = vmatpush.bf16.msra.mxu0 %v540
    %702 = vmatpush.bf16.msra.mxu0 %v539
    %703 = vmatpush.bf16.msra.mxu0 %v538
    %704 = vmatmul.bf16.gmra.mxu0 %v224
    %v705 = vpop.f32.mrf.mxu0
    %v706 = vadd.f32 %v693, %v705
    %v707 = vpop.f32.mrf.mxu0
    %708 = vdwg.mxu0
    %709 = vmatpush.bf16.msra.mxu0 %v553
    %710 = vmatpush.bf16.msra.mxu0 %v552
    %711 = vmatpush.bf16.msra.mxu0 %v551
    %712 = vmatpush.bf16.msra.mxu0 %v550
    %713 = vmatpush.bf16.msra.mxu0 %v549
    %714 = vmatpush.bf16.msra.mxu0 %v548
    %715 = vmatpush.bf16.msra.mxu0 %v547
    %716 = vmatpush.bf16.msra.mxu0 %v546
    %717 = vmatmul.bf16.gmra.mxu0 %v225
    %v718 = vpop.f32.mrf.mxu0
    %v719 = vadd.f32 %v706, %v718
    %v720 = vpop.f32.mrf.mxu0
    %721 = vdwg.mxu0
    %v722 = vadd.f32 %v215, %v719
    %723 = vst [vmem:[#allocation2] sm:$0x3] %v722
    %v724 = vld [vmem:[#allocation3] sm:$0x3]
    %726 = vst [vmem:[#allocation1] ss:$9 sm:$0xff] %v86
    %v727 = vld [vmem:[#allocation1] sm:$0xff]
    %v728 = vld [vmem:[#allocation1 + $0x9] sm:$0xff]
    %v729 = vld [vmem:[#allocation1 + $0x12] sm:$0xff]
    %v730 = vld [vmem:[#allocation1 + $0x1b] sm:$0xff]
    %v731 = vld [vmem:[#allocation1 + $0x24] sm:$0xff]
    %v732 = vld [vmem:[#allocation1 + $0x2d] sm:$0xff]
    %v733 = vld [vmem:[#allocation1 + $0x36] sm:$0xff]
    %v734 = vld [vmem:[#allocation1 + $0x3f] sm:$0xff]
    %743 = vmatpush.bf16.msra.mxu0 %v497
    %744 = vmatpush.bf16.msra.mxu0 %v496
    %745 = vmatpush.bf16.msra.mxu0 %v495
    %746 = vmatpush.bf16.msra.mxu0 %v494
    %747 = vmatpush.bf16.msra.mxu0 %v493
    %748 = vmatpush.bf16.msra.mxu0 %v492
    %749 = vmatpush.bf16.msra.mxu0 %v491
    %750 = vmatpush.bf16.msra.mxu0 %v490
    %751 = vmatmul.bf16.gmra.mxu0 %v727
    %v752 = vpop.f32.mrf.mxu0
    %v753 = vadd.f32 0.0, %v752
    %v754 = vpop.f32.mrf.mxu0
    %755 = vdwg.mxu0
    %756 = vmatpush.bf16.msra.mxu0 %v505
    %757 = vmatpush.bf16.msra.mxu0 %v504
    %758 = vmatpush.bf16.msra.mxu0 %v503
    %759 = vmatpush.bf16.msra.mxu0 %v502
    %760 = vmatpush.bf16.msra.mxu0 %v501
    %761 = vmatpush.bf16.msra.mxu0 %v500
    %762 = vmatpush.bf16.msra.mxu0 %v499
    %763 = vmatpush.bf16.msra.mxu0 %v498
    %764 = vmatmul.bf16.gmra.mxu0 %v728
    %v765 = vpop.f32.mrf.mxu0
    %v766 = vadd.f32 %v753, %v765
    %v767 = vpop.f32.mrf.mxu0
    %768 = vdwg.mxu0
    %769 = vmatpush.bf16.msra.mxu0 %v513
    %770 = vmatpush.bf16.msra.mxu0 %v512
    %771 = vmatpush.bf16.msra.mxu0 %v511
    %772 = vmatpush.bf16.msra.mxu0 %v510
    %773 = vmatpush.bf16.msra.mxu0 %v509
    %774 = vmatpush.bf16.msra.mxu0 %v508
    %775 = vmatpush.bf16.msra.mxu0 %v507
    %776 = vmatpush.bf16.msra.mxu0 %v506
    %777 = vmatmul.bf16.gmra.mxu0 %v729
    %v778 = vpop.f32.mrf.mxu0
    %v779 = vadd.f32 %v766, %v778
    %v780 = vpop.f32.mrf.mxu0
    %781 = vdwg.mxu0
    %782 = vmatpush.bf16.msra.mxu0 %v521
    %783 = vmatpush.bf16.msra.mxu0 %v520
    %784 = vmatpush.bf16.msra.mxu0 %v519
    %785 = vmatpush.bf16.msra.mxu0 %v518
    %786 = vmatpush.bf16.msra.mxu0 %v517
    %787 = vmatpush.bf16.msra.mxu0 %v516
    %788 = vmatpush.bf16.msra.mxu0 %v515
    %789 = vmatpush.bf16.msra.mxu0 %v514
    %790 = vmatmul.bf16.gmra.mxu0 %v730
    %v791 = vpop.f32.mrf.mxu0
    %v792 = vadd.f32 %v779, %v791
    %v793 = vpop.f32.mrf.mxu0
    %794 = vdwg.mxu0
    %795 = vmatpush.bf16.msra.mxu0 %v529
    %796 = vmatpush.bf16.msra.mxu0 %v528
    %797 = vmatpush.bf16.msra.mxu0 %v527
    %798 = vmatpush.bf16.msra.mxu0 %v526
    %799 = vmatpush.bf16.msra.mxu0 %v525
    %800 = vmatpush.bf16.msra.mxu0 %v524
    %801 = vmatpush.bf16.msra.mxu0 %v523
    %802 = vmatpush.bf16.msra.mxu0 %v522
    %803 = vmatmul.bf16.gmra.mxu0 %v731
    %v804 = vpop.f32.mrf.mxu0
    %v805 = vadd.f32 %v792, %v804
    %v806 = vpop.f32.mrf.mxu0
    %807 = vdwg.mxu0
    %808 = vmatpush.bf16.msra.mxu0 %v537
    %809 = vmatpush.bf16.msra.mxu0 %v536
    %810 = vmatpush.bf16.msra.mxu0 %v535
    %811 = vmatpush.bf16.msra.mxu0 %v534
    %812 = vmatpush.bf16.msra.mxu0 %v533
    %813 = vmatpush.bf16.msra.mxu0 %v532
    %814 = vmatpush.bf16.msra.mxu0 %v531
    %815 = vmatpush.bf16.msra.mxu0 %v530
    %816 = vmatmul.bf16.gmra.mxu0 %v732
    %v817 = vpop.f32.mrf.mxu0
    %v818 = vadd.f32 %v805, %v817
    %v819 = vpop.f32.mrf.mxu0
    %820 = vdwg.mxu0
    %821 = vmatpush.bf16.msra.mxu0 %v545
    %822 = vmatpush.bf16.msra.mxu0 %v544
    %823 = vmatpush.bf16.msra.mxu0 %v543
    %824 = vmatpush.bf16.msra.mxu0 %v542
    %825 = vmatpush.bf16.msra.mxu0 %v541
    %826 = vmatpush.bf16.msra.mxu0 %v540
    %827 = vmatpush.bf16.msra.mxu0 %v539
    %828 = vmatpush.bf16.msra.mxu0 %v538
    %829 = vmatmul.bf16.gmra.mxu0 %v733
    %v830 = vpop.f32.mrf.mxu0
    %v831 = vadd.f32 %v818, %v830
    %v832 = vpop.f32.mrf.mxu0
    %833 = vdwg.mxu0
    %834 = vmatpush.bf16.msra.mxu0 %v553
    %835 = vmatpush.bf16.msra.mxu0 %v552
    %836 = vmatpush.bf16.msra.mxu0 %v551
    %837 = vmatpush.bf16.msra.mxu0 %v550
    %838 = vmatpush.bf16.msra.mxu0 %v549
    %839 = vmatpush.bf16.msra.mxu0 %v548
    %840 = vmatpush.bf16.msra.mxu0 %v547
    %841 = vmatpush.bf16.msra.mxu0 %v546
    %842 = vmatmul.bf16.gmra.mxu0 %v734
    %v843 = vpop.f32.mrf.mxu0
    %v844 = vadd.f32 %v831, %v843
    %v845 = vpop.f32.mrf.mxu0
    %846 = vdwg.mxu0
    %v847 = vadd.f32 %v724, %v844
    %848 = vst [vmem:[#allocation3] sm:$0x3] %v847
    %v849 = vunpack.c.l.bf16 %v86
    %v850 = vunpack.c.h.bf16 %v86
    %v851 = vld [vmem:[#allocation4] sm:$0x3]
    %v852 = vmul.f32 %v849, %v849
    %v853 = vmul.f32 %v850, %v850
    %856 = vst [vmem:[#allocation1] ss:$4 sm:$0xff] %v852
    %s857 = scalar_lea.vmem [#allocation1], 32
    %858 = vst [vmem:[%s857] ss:$4 sm:$0xff] %v853
    %v859 = vld.sshfl [vmem:[#allocation1] sm:$0xff pattern:$0x73625140]
    %v860 = vld.sshfl [vmem:[#allocation1 + $0x8] sm:$0xff pattern:$0x73625140]
    %v861 = vld.sshfl [vmem:[#allocation1 + $0x10] sm:$0xff pattern:$0x73625140]
    %v862 = vld.sshfl [vmem:[#allocation1 + $0x18] sm:$0xff pattern:$0x73625140]
    %v863 = vld.sshfl [vmem:[#allocation1 + $0x20] sm:$0xff pattern:$0x73625140]
    %v864 = vld.sshfl [vmem:[#allocation1 + $0x28] sm:$0xff pattern:$0x73625140]
    %v865 = vld.sshfl [vmem:[#allocation1 + $0x30] sm:$0xff pattern:$0x73625140]
    %v866 = vld.sshfl [vmem:[#allocation1 + $0x38] sm:$0xff pattern:$0x73625140]
    %vm875 = vcmask 1041408
    %v876 = vsel %vm875, %v859, 0.0
    %v877 = vsel %vm875, %v860, 0.0
    %v878 = vadd.f32 %v876, %v877
    %v879 = vsel %vm875, %v861, 0.0
    %v880 = vadd.f32 %v878, %v879
    %v881 = vsel %vm875, %v862, 0.0
    %v882 = vadd.f32 %v880, %v881
    %v883 = vsel %vm875, %v863, 0.0
    %v884 = vadd.f32 %v882, %v883
    %v885 = vsel %vm875, %v864, 0.0
    %v886 = vadd.f32 %v884, %v885
    %v887 = vsel %vm875, %v865, 0.0
    %v888 = vadd.f32 %v886, %v887
    %v889 = vsel %vm875, %v866, 0.0
    %v890 = vadd.f32 %v888, %v889
    %891 = vadd.xlane.f32.xlu0 %v890
    %v892 = vpop.xlane.xlu0 %891
    %v893 = vadd.f32 %v851, %v892
    %vm894 = vcmask 1024
    %895 = vst.msk [vmem:[#allocation4] sm:$0x3] %vm894, %v893
    %v896 = vld [vmem:[#allocation5] sm:$0xff]
    %v897 = vld [vmem:[#allocation5 + $0x8] sm:$0xff]
    %v898 = vld [vmem:[#allocation5 + $0x10] sm:$0xff]
    %v899 = vld [vmem:[#allocation5 + $0x18] sm:$0xff]
    %v900 = vld [vmem:[#allocation5 + $0x20] sm:$0xff]
    %v901 = vld [vmem:[#allocation5 + $0x28] sm:$0xff]
    %v902 = vld [vmem:[#allocation5 + $0x30] sm:$0xff]
    %v903 = vld [vmem:[#allocation5 + $0x38] sm:$0xff]
    %v904 = vld [vmem:[#allocation5 + $0x40] sm:$0xff]
    %v905 = vld [vmem:[#allocation5 + $0x48] sm:$0xff]
    %v906 = vld [vmem:[#allocation5 + $0x50] sm:$0xff]
    %v907 = vld [vmem:[#allocation5 + $0x58] sm:$0xff]
    %v908 = vld [vmem:[#allocation5 + $0x60] sm:$0xff]
    %v909 = vld [vmem:[#allocation5 + $0x68] sm:$0xff]
    %v910 = vld [vmem:[#allocation5 + $0x70] sm:$0xff]
    %v911 = vld [vmem:[#allocation5 + $0x78] sm:$0xff]
    %912 = vxpose.xlu0.c.b16.start [1/8] %v490, 128
    %913 = vxpose.xlu0.c.b16.cont [2/8] %v491, 128
    %914 = vxpose.xlu0.c.b16.cont [3/8] %v492, 128
    %915 = vxpose.xlu0.c.b16.cont [4/8] %v493, 128
    %916 = vxpose.xlu0.c.b16.cont [5/8] %v494, 128
    %917 = vxpose.xlu0.c.b16.cont [6/8] %v495, 128
    %918 = vxpose.xlu0.c.b16.cont [7/8] %v496, 128
    %919 = vxpose.xlu0.c.b16.end [8/8] %v497, 128
    %v920 = vpop.trf.xlu0
    %v921 = vpop.trf.xlu0
    %v922 = vpop.trf.xlu0
    %v923 = vpop.trf.xlu0
    %v924 = vpop.trf.xlu0
    %v925 = vpop.trf.xlu0
    %v926 = vpop.trf.xlu0
    %v927 = vpop.trf.xlu0
    %928 = vxpose.xlu0.c.b16.start [1/8] %v498, 128
    %929 = vxpose.xlu0.c.b16.cont [2/8] %v499, 128
    %930 = vxpose.xlu0.c.b16.cont [3/8] %v500, 128
    %931 = vxpose.xlu0.c.b16.cont [4/8] %v501, 128
    %932 = vxpose.xlu0.c.b16.cont [5/8] %v502, 128
    %933 = vxpose.xlu0.c.b16.cont [6/8] %v503, 128
    %934 = vxpose.xlu0.c.b16.cont [7/8] %v504, 128
    %935 = vxpose.xlu0.c.b16.end [8/8] %v505, 128
    %v936 = vpop.trf.xlu0
    %v937 = vpop.trf.xlu0
    %v938 = vpop.trf.xlu0
    %v939 = vpop.trf.xlu0
    %v940 = vpop.trf.xlu0
    %v941 = vpop.trf.xlu0
    %v942 = vpop.trf.xlu0
    %v943 = vpop.trf.xlu0
    %944 = vxpose.xlu0.c.b16.start [1/8] %v506, 128
    %945 = vxpose.xlu0.c.b16.cont [2/8] %v507, 128
    %946 = vxpose.xlu0.c.b16.cont [3/8] %v508, 128
    %947 = vxpose.xlu0.c.b16.cont [4/8] %v509, 128
    %948 = vxpose.xlu0.c.b16.cont [5/8] %v510, 128
    %949 = vxpose.xlu0.c.b16.cont [6/8] %v511, 128
    %950 = vxpose.xlu0.c.b16.cont [7/8] %v512, 128
    %951 = vxpose.xlu0.c.b16.end [8/8] %v513, 128
    %v952 = vpop.trf.xlu0
    %v953 = vpop.trf.xlu0
    %v954 = vpop.trf.xlu0
    %v955 = vpop.trf.xlu0
    %v956 = vpop.trf.xlu0
    %v957 = vpop.trf.xlu0
    %v958 = vpop.trf.xlu0
    %v959 = vpop.trf.xlu0
    %960 = vxpose.xlu0.c.b16.start [1/8] %v514, 128
    %961 = vxpose.xlu0.c.b16.cont [2/8] %v515, 128
    %962 = vxpose.xlu0.c.b16.cont [3/8] %v516, 128
    %963 = vxpose.xlu0.c.b16.cont [4/8] %v517, 128
    %964 = vxpose.xlu0.c.b16.cont [5/8] %v518, 128
    %965 = vxpose.xlu0.c.b16.cont [6/8] %v519, 128
    %966 = vxpose.xlu0.c.b16.cont [7/8] %v520, 128
    %967 = vxpose.xlu0.c.b16.end [8/8] %v521, 128
    %v968 = vpop.trf.xlu0
    %v969 = vpop.trf.xlu0
    %v970 = vpop.trf.xlu0
    %v971 = vpop.trf.xlu0
    %v972 = vpop.trf.xlu0
    %v973 = vpop.trf.xlu0
    %v974 = vpop.trf.xlu0
    %v975 = vpop.trf.xlu0
    %976 = vxpose.xlu0.c.b16.start [1/8] %v522, 128
    %977 = vxpose.xlu0.c.b16.cont [2/8] %v523, 128
    %978 = vxpose.xlu0.c.b16.cont [3/8] %v524, 128
    %979 = vxpose.xlu0.c.b16.cont [4/8] %v525, 128
    %980 = vxpose.xlu0.c.b16.cont [5/8] %v526, 128
    %981 = vxpose.xlu0.c.b16.cont [6/8] %v527, 128
    %982 = vxpose.xlu0.c.b16.cont [7/8] %v528, 128
    %983 = vxpose.xlu0.c.b16.end [8/8] %v529, 128
    %v984 = vpop.trf.xlu0
    %v985 = vpop.trf.xlu0
    %v986 = vpop.trf.xlu0
    %v987 = vpop.trf.xlu0
    %v988 = vpop.trf.xlu0
    %v989 = vpop.trf.xlu0
    %v990 = vpop.trf.xlu0
    %v991 = vpop.trf.xlu0
    %992 = vxpose.xlu0.c.b16.start [1/8] %v530, 128
    %993 = vxpose.xlu0.c.b16.cont [2/8] %v531, 128
    %994 = vxpose.xlu0.c.b16.cont [3/8] %v532, 128
    %995 = vxpose.xlu0.c.b16.cont [4/8] %v533, 128
    %996 = vxpose.xlu0.c.b16.cont [5/8] %v534, 128
    %997 = vxpose.xlu0.c.b16.cont [6/8] %v535, 128
    %998 = vxpose.xlu0.c.b16.cont [7/8] %v536, 128
    %999 = vxpose.xlu0.c.b16.end [8/8] %v537, 128
    %v1000 = vpop.trf.xlu0
    %v1001 = vpop.trf.xlu0
    %v1002 = vpop.trf.xlu0
    %v1003 = vpop.trf.xlu0
    %v1004 = vpop.trf.xlu0
    %v1005 = vpop.trf.xlu0
    %v1006 = vpop.trf.xlu0
    %v1007 = vpop.trf.xlu0
    %1008 = vxpose.xlu0.c.b16.start [1/8] %v538, 128
    %1009 = vxpose.xlu0.c.b16.cont [2/8] %v539, 128
    %1010 = vxpose.xlu0.c.b16.cont [3/8] %v540, 128
    %1011 = vxpose.xlu0.c.b16.cont [4/8] %v541, 128
    %1012 = vxpose.xlu0.c.b16.cont [5/8] %v542, 128
    %1013 = vxpose.xlu0.c.b16.cont [6/8] %v543, 128
    %1014 = vxpose.xlu0.c.b16.cont [7/8] %v544, 128
    %1015 = vxpose.xlu0.c.b16.end [8/8] %v545, 128
    %v1016 = vpop.trf.xlu0
    %v1017 = vpop.trf.xlu0
    %v1018 = vpop.trf.xlu0
    %v1019 = vpop.trf.xlu0
    %v1020 = vpop.trf.xlu0
    %v1021 = vpop.trf.xlu0
    %v1022 = vpop.trf.xlu0
    %v1023 = vpop.trf.xlu0
    %1024 = vxpose.xlu0.c.b16.start [1/8] %v546, 128
    %1025 = vxpose.xlu0.c.b16.cont [2/8] %v547, 128
    %1026 = vxpose.xlu0.c.b16.cont [3/8] %v548, 128
    %1027 = vxpose.xlu0.c.b16.cont [4/8] %v549, 128
    %1028 = vxpose.xlu0.c.b16.cont [5/8] %v550, 128
    %1029 = vxpose.xlu0.c.b16.cont [6/8] %v551, 128
    %1030 = vxpose.xlu0.c.b16.cont [7/8] %v552, 128
    %1031 = vxpose.xlu0.c.b16.end [8/8] %v553, 128
    %v1032 = vpop.trf.xlu0
    %v1033 = vpop.trf.xlu0
    %v1034 = vpop.trf.xlu0
    %v1035 = vpop.trf.xlu0
    %v1036 = vpop.trf.xlu0
    %v1037 = vpop.trf.xlu0
    %v1038 = vpop.trf.xlu0
    %v1039 = vpop.trf.xlu0
    %1040 = vmatpush.bf16.msra.mxu0 %v497
    %1041 = vmatpush.bf16.msra.mxu0 %v496
    %1042 = vmatpush.bf16.msra.mxu0 %v495
    %1043 = vmatpush.bf16.msra.mxu0 %v494
    %1044 = vmatpush.bf16.msra.mxu0 %v493
    %1045 = vmatpush.bf16.msra.mxu0 %v492
    %1046 = vmatpush.bf16.msra.mxu0 %v491
    %1047 = vmatpush.bf16.msra.mxu0 %v490
    %1048 = vmatmul.bf16.gmra.mxu0 %v920
    %v1049 = vpop.f32.mrf.mxu0
    %v1050 = vadd.f32 0.0, %v1049
    %v1051 = vpop.f32.mrf.mxu0
    %v1052 = vadd.f32 0.0, %v1051
    %1053 = vmatmul.bf16.gmra.mxu0 %v921
    %v1054 = vpop.f32.mrf.mxu0
    %v1055 = vadd.f32 0.0, %v1054
    %v1056 = vpop.f32.mrf.mxu0
    %v1057 = vadd.f32 0.0, %v1056
    %1058 = vmatmul.bf16.gmra.mxu0 %v922
    %v1059 = vpop.f32.mrf.mxu0
    %v1060 = vadd.f32 0.0, %v1059
    %v1061 = vpop.f32.mrf.mxu0
    %v1062 = vadd.f32 0.0, %v1061
    %1063 = vmatmul.bf16.gmra.mxu0 %v923
    %v1064 = vpop.f32.mrf.mxu0
    %v1065 = vadd.f32 0.0, %v1064
    %v1066 = vpop.f32.mrf.mxu0
    %v1067 = vadd.f32 0.0, %v1066
    %1068 = vmatmul.bf16.gmra.mxu0 %v924
    %v1069 = vpop.f32.mrf.mxu0
    %v1070 = vadd.f32 0.0, %v1069
    %v1071 = vpop.f32.mrf.mxu0
    %v1072 = vadd.f32 0.0, %v1071
    %1073 = vmatmul.bf16.gmra.mxu0 %v925
    %v1074 = vpop.f32.mrf.mxu0
    %v1075 = vadd.f32 0.0, %v1074
    %v1076 = vpop.f32.mrf.mxu0
    %v1077 = vadd.f32 0.0, %v1076
    %1078 = vmatmul.bf16.gmra.mxu0 %v926
    %v1079 = vpop.f32.mrf.mxu0
    %v1080 = vadd.f32 0.0, %v1079
    %v1081 = vpop.f32.mrf.mxu0
    %v1082 = vadd.f32 0.0, %v1081
    %1083 = vmatmul.bf16.gmra.mxu0 %v927
    %v1084 = vpop.f32.mrf.mxu0
    %v1085 = vadd.f32 0.0, %v1084
    %v1086 = vpop.f32.mrf.mxu0
    %v1087 = vadd.f32 0.0, %v1086
    %1088 = vdwg.mxu0
    %1089 = vmatpush.bf16.msra.mxu0 %v505
    %1090 = vmatpush.bf16.msra.mxu0 %v504
    %1091 = vmatpush.bf16.msra.mxu0 %v503
    %1092 = vmatpush.bf16.msra.mxu0 %v502
    %1093 = vmatpush.bf16.msra.mxu0 %v501
    %1094 = vmatpush.bf16.msra.mxu0 %v500
    %1095 = vmatpush.bf16.msra.mxu0 %v499
    %1096 = vmatpush.bf16.msra.mxu0 %v498
    %1097 = vmatmul.bf16.gmra.mxu0 %v936
    %v1098 = vpop.f32.mrf.mxu0
    %v1099 = vadd.f32 %v1050, %v1098
    %v1100 = vpop.f32.mrf.mxu0
    %v1101 = vadd.f32 %v1052, %v1100
    %1102 = vmatmul.bf16.gmra.mxu0 %v937
    %v1103 = vpop.f32.mrf.mxu0
    %v1104 = vadd.f32 %v1055, %v1103
    %v1105 = vpop.f32.mrf.mxu0
    %v1106 = vadd.f32 %v1057, %v1105
    %1107 = vmatmul.bf16.gmra.mxu0 %v938
    %v1108 = vpop.f32.mrf.mxu0
    %v1109 = vadd.f32 %v1060, %v1108
    %v1110 = vpop.f32.mrf.mxu0
    %v1111 = vadd.f32 %v1062, %v1110
    %1112 = vmatmul.bf16.gmra.mxu0 %v939
    %v1113 = vpop.f32.mrf.mxu0
    %v1114 = vadd.f32 %v1065, %v1113
    %v1115 = vpop.f32.mrf.mxu0
    %v1116 = vadd.f32 %v1067, %v1115
    %1117 = vmatmul.bf16.gmra.mxu0 %v940
    %v1118 = vpop.f32.mrf.mxu0
    %v1119 = vadd.f32 %v1070, %v1118
    %v1120 = vpop.f32.mrf.mxu0
    %v1121 = vadd.f32 %v1072, %v1120
    %1122 = vmatmul.bf16.gmra.mxu0 %v941
    %v1123 = vpop.f32.mrf.mxu0
    %v1124 = vadd.f32 %v1075, %v1123
    %v1125 = vpop.f32.mrf.mxu0
    %v1126 = vadd.f32 %v1077, %v1125
    %1127 = vmatmul.bf16.gmra.mxu0 %v942
    %v1128 = vpop.f32.mrf.mxu0
    %v1129 = vadd.f32 %v1080, %v1128
    %v1130 = vpop.f32.mrf.mxu0
    %v1131 = vadd.f32 %v1082, %v1130
    %1132 = vmatmul.bf16.gmra.mxu0 %v943
    %v1133 = vpop.f32.mrf.mxu0
    %v1134 = vadd.f32 %v1085, %v1133
    %v1135 = vpop.f32.mrf.mxu0
    %v1136 = vadd.f32 %v1087, %v1135
    %1137 = vdwg.mxu0
    %1138 = vmatpush.bf16.msra.mxu0 %v513
    %1139 = vmatpush.bf16.msra.mxu0 %v512
    %1140 = vmatpush.bf16.msra.mxu0 %v511
    %1141 = vmatpush.bf16.msra.mxu0 %v510
    %1142 = vmatpush.bf16.msra.mxu0 %v509
    %1143 = vmatpush.bf16.msra.mxu0 %v508
    %1144 = vmatpush.bf16.msra.mxu0 %v507
    %1145 = vmatpush.bf16.msra.mxu0 %v506
    %1146 = vmatmul.bf16.gmra.mxu0 %v952
    %v1147 = vpop.f32.mrf.mxu0
    %v1148 = vadd.f32 %v1099, %v1147
    %v1149 = vpop.f32.mrf.mxu0
    %v1150 = vadd.f32 %v1101, %v1149
    %1151 = vmatmul.bf16.gmra.mxu0 %v953
    %v1152 = vpop.f32.mrf.mxu0
    %v1153 = vadd.f32 %v1104, %v1152
    %v1154 = vpop.f32.mrf.mxu0
    %v1155 = vadd.f32 %v1106, %v1154
    %1156 = vmatmul.bf16.gmra.mxu0 %v954
    %v1157 = vpop.f32.mrf.mxu0
    %v1158 = vadd.f32 %v1109, %v1157
    %v1159 = vpop.f32.mrf.mxu0
    %v1160 = vadd.f32 %v1111, %v1159
    %1161 = vmatmul.bf16.gmra.mxu0 %v955
    %v1162 = vpop.f32.mrf.mxu0
    %v1163 = vadd.f32 %v1114, %v1162
    %v1164 = vpop.f32.mrf.mxu0
    %v1165 = vadd.f32 %v1116, %v1164
    %1166 = vmatmul.bf16.gmra.mxu0 %v956
    %v1167 = vpop.f32.mrf.mxu0
    %v1168 = vadd.f32 %v1119, %v1167
    %v1169 = vpop.f32.mrf.mxu0
    %v1170 = vadd.f32 %v1121, %v1169
    %1171 = vmatmul.bf16.gmra.mxu0 %v957
    %v1172 = vpop.f32.mrf.mxu0
    %v1173 = vadd.f32 %v1124, %v1172
    %v1174 = vpop.f32.mrf.mxu0
    %v1175 = vadd.f32 %v1126, %v1174
    %1176 = vmatmul.bf16.gmra.mxu0 %v958
    %v1177 = vpop.f32.mrf.mxu0
    %v1178 = vadd.f32 %v1129, %v1177
    %v1179 = vpop.f32.mrf.mxu0
    %v1180 = vadd.f32 %v1131, %v1179
    %1181 = vmatmul.bf16.gmra.mxu0 %v959
    %v1182 = vpop.f32.mrf.mxu0
    %v1183 = vadd.f32 %v1134, %v1182
    %v1184 = vpop.f32.mrf.mxu0
    %v1185 = vadd.f32 %v1136, %v1184
    %1186 = vdwg.mxu0
    %1187 = vmatpush.bf16.msra.mxu0 %v521
    %1188 = vmatpush.bf16.msra.mxu0 %v520
    %1189 = vmatpush.bf16.msra.mxu0 %v519
    %1190 = vmatpush.bf16.msra.mxu0 %v518
    %1191 = vmatpush.bf16.msra.mxu0 %v517
    %1192 = vmatpush.bf16.msra.mxu0 %v516
    %1193 = vmatpush.bf16.msra.mxu0 %v515
    %1194 = vmatpush.bf16.msra.mxu0 %v514
    %1195 = vmatmul.bf16.gmra.mxu0 %v968
    %v1196 = vpop.f32.mrf.mxu0
    %v1197 = vadd.f32 %v1148, %v1196
    %v1198 = vpop.f32.mrf.mxu0
    %v1199 = vadd.f32 %v1150, %v1198
    %1200 = vmatmul.bf16.gmra.mxu0 %v969
    %v1201 = vpop.f32.mrf.mxu0
    %v1202 = vadd.f32 %v1153, %v1201
    %v1203 = vpop.f32.mrf.mxu0
    %v1204 = vadd.f32 %v1155, %v1203
    %1205 = vmatmul.bf16.gmra.mxu0 %v970
    %v1206 = vpop.f32.mrf.mxu0
    %v1207 = vadd.f32 %v1158, %v1206
    %v1208 = vpop.f32.mrf.mxu0
    %v1209 = vadd.f32 %v1160, %v1208
    %1210 = vmatmul.bf16.gmra.mxu0 %v971
    %v1211 = vpop.f32.mrf.mxu0
    %v1212 = vadd.f32 %v1163, %v1211
    %v1213 = vpop.f32.mrf.mxu0
    %v1214 = vadd.f32 %v1165, %v1213
    %1215 = vmatmul.bf16.gmra.mxu0 %v972
    %v1216 = vpop.f32.mrf.mxu0
    %v1217 = vadd.f32 %v1168, %v1216
    %v1218 = vpop.f32.mrf.mxu0
    %v1219 = vadd.f32 %v1170, %v1218
    %1220 = vmatmul.bf16.gmra.mxu0 %v973
    %v1221 = vpop.f32.mrf.mxu0
    %v1222 = vadd.f32 %v1173, %v1221
    %v1223 = vpop.f32.mrf.mxu0
    %v1224 = vadd.f32 %v1175, %v1223
    %1225 = vmatmul.bf16.gmra.mxu0 %v974
    %v1226 = vpop.f32.mrf.mxu0
    %v1227 = vadd.f32 %v1178, %v1226
    %v1228 = vpop.f32.mrf.mxu0
    %v1229 = vadd.f32 %v1180, %v1228
    %1230 = vmatmul.bf16.gmra.mxu0 %v975
    %v1231 = vpop.f32.mrf.mxu0
    %v1232 = vadd.f32 %v1183, %v1231
    %v1233 = vpop.f32.mrf.mxu0
    %v1234 = vadd.f32 %v1185, %v1233
    %1235 = vdwg.mxu0
    %1236 = vmatpush.bf16.msra.mxu0 %v529
    %1237 = vmatpush.bf16.msra.mxu0 %v528
    %1238 = vmatpush.bf16.msra.mxu0 %v527
    %1239 = vmatpush.bf16.msra.mxu0 %v526
    %1240 = vmatpush.bf16.msra.mxu0 %v525
    %1241 = vmatpush.bf16.msra.mxu0 %v524
    %1242 = vmatpush.bf16.msra.mxu0 %v523
    %1243 = vmatpush.bf16.msra.mxu0 %v522
    %1244 = vmatmul.bf16.gmra.mxu0 %v984
    %v1245 = vpop.f32.mrf.mxu0
    %v1246 = vadd.f32 %v1197, %v1245
    %v1247 = vpop.f32.mrf.mxu0
    %v1248 = vadd.f32 %v1199, %v1247
    %1249 = vmatmul.bf16.gmra.mxu0 %v985
    %v1250 = vpop.f32.mrf.mxu0
    %v1251 = vadd.f32 %v1202, %v1250
    %v1252 = vpop.f32.mrf.mxu0
    %v1253 = vadd.f32 %v1204, %v1252
    %1254 = vmatmul.bf16.gmra.mxu0 %v986
    %v1255 = vpop.f32.mrf.mxu0
    %v1256 = vadd.f32 %v1207, %v1255
    %v1257 = vpop.f32.mrf.mxu0
    %v1258 = vadd.f32 %v1209, %v1257
    %1259 = vmatmul.bf16.gmra.mxu0 %v987
    %v1260 = vpop.f32.mrf.mxu0
    %v1261 = vadd.f32 %v1212, %v1260
    %v1262 = vpop.f32.mrf.mxu0
    %v1263 = vadd.f32 %v1214, %v1262
    %1264 = vmatmul.bf16.gmra.mxu0 %v988
    %v1265 = vpop.f32.mrf.mxu0
    %v1266 = vadd.f32 %v1217, %v1265
    %v1267 = vpop.f32.mrf.mxu0
    %v1268 = vadd.f32 %v1219, %v1267
    %1269 = vmatmul.bf16.gmra.mxu0 %v989
    %v1270 = vpop.f32.mrf.mxu0
    %v1271 = vadd.f32 %v1222, %v1270
    %v1272 = vpop.f32.mrf.mxu0
    %v1273 = vadd.f32 %v1224, %v1272
    %1274 = vmatmul.bf16.gmra.mxu0 %v990
    %v1275 = vpop.f32.mrf.mxu0
    %v1276 = vadd.f32 %v1227, %v1275
    %v1277 = vpop.f32.mrf.mxu0
    %v1278 = vadd.f32 %v1229, %v1277
    %1279 = vmatmul.bf16.gmra.mxu0 %v991
    %v1280 = vpop.f32.mrf.mxu0
    %v1281 = vadd.f32 %v1232, %v1280
    %v1282 = vpop.f32.mrf.mxu0
    %v1283 = vadd.f32 %v1234, %v1282
    %1284 = vdwg.mxu0
    %1285 = vmatpush.bf16.msra.mxu0 %v537
    %1286 = vmatpush.bf16.msra.mxu0 %v536
    %1287 = vmatpush.bf16.msra.mxu0 %v535
    %1288 = vmatpush.bf16.msra.mxu0 %v534
    %1289 = vmatpush.bf16.msra.mxu0 %v533
    %1290 = vmatpush.bf16.msra.mxu0 %v532
    %1291 = vmatpush.bf16.msra.mxu0 %v531
    %1292 = vmatpush.bf16.msra.mxu0 %v530
    %1293 = vmatmul.bf16.gmra.mxu0 %v1000
    %v1294 = vpop.f32.mrf.mxu0
    %v1295 = vadd.f32 %v1246, %v1294
    %v1296 = vpop.f32.mrf.mxu0
    %v1297 = vadd.f32 %v1248, %v1296
    %1298 = vmatmul.bf16.gmra.mxu0 %v1001
    %v1299 = vpop.f32.mrf.mxu0
    %v1300 = vadd.f32 %v1251, %v1299
    %v1301 = vpop.f32.mrf.mxu0
    %v1302 = vadd.f32 %v1253, %v1301
    %1303 = vmatmul.bf16.gmra.mxu0 %v1002
    %v1304 = vpop.f32.mrf.mxu0
    %v1305 = vadd.f32 %v1256, %v1304
    %v1306 = vpop.f32.mrf.mxu0
    %v1307 = vadd.f32 %v1258, %v1306
    %1308 = vmatmul.bf16.gmra.mxu0 %v1003
    %v1309 = vpop.f32.mrf.mxu0
    %v1310 = vadd.f32 %v1261, %v1309
    %v1311 = vpop.f32.mrf.mxu0
    %v1312 = vadd.f32 %v1263, %v1311
    %1313 = vmatmul.bf16.gmra.mxu0 %v1004
    %v1314 = vpop.f32.mrf.mxu0
    %v1315 = vadd.f32 %v1266, %v1314
    %v1316 = vpop.f32.mrf.mxu0
    %v1317 = vadd.f32 %v1268, %v1316
    %1318 = vmatmul.bf16.gmra.mxu0 %v1005
    %v1319 = vpop.f32.mrf.mxu0
    %v1320 = vadd.f32 %v1271, %v1319
    %v1321 = vpop.f32.mrf.mxu0
    %v1322 = vadd.f32 %v1273, %v1321
    %1323 = vmatmul.bf16.gmra.mxu0 %v1006
    %v1324 = vpop.f32.mrf.mxu0
    %v1325 = vadd.f32 %v1276, %v1324
    %v1326 = vpop.f32.mrf.mxu0
    %v1327 = vadd.f32 %v1278, %v1326
    %1328 = vmatmul.bf16.gmra.mxu0 %v1007
    %v1329 = vpop.f32.mrf.mxu0
    %v1330 = vadd.f32 %v1281, %v1329
    %v1331 = vpop.f32.mrf.mxu0
    %v1332 = vadd.f32 %v1283, %v1331
    %1333 = vdwg.mxu0
    %1334 = vmatpush.bf16.msra.mxu0 %v545
    %1335 = vmatpush.bf16.msra.mxu0 %v544
    %1336 = vmatpush.bf16.msra.mxu0 %v543
    %1337 = vmatpush.bf16.msra.mxu0 %v542
    %1338 = vmatpush.bf16.msra.mxu0 %v541
    %1339 = vmatpush.bf16.msra.mxu0 %v540
    %1340 = vmatpush.bf16.msra.mxu0 %v539
    %1341 = vmatpush.bf16.msra.mxu0 %v538
    %1342 = vmatmul.bf16.gmra.mxu0 %v1016
    %v1343 = vpop.f32.mrf.mxu0
    %v1344 = vadd.f32 %v1295, %v1343
    %v1345 = vpop.f32.mrf.mxu0
    %v1346 = vadd.f32 %v1297, %v1345
    %1347 = vmatmul.bf16.gmra.mxu0 %v1017
    %v1348 = vpop.f32.mrf.mxu0
    %v1349 = vadd.f32 %v1300, %v1348
    %v1350 = vpop.f32.mrf.mxu0
    %v1351 = vadd.f32 %v1302, %v1350
    %1352 = vmatmul.bf16.gmra.mxu0 %v1018
    %v1353 = vpop.f32.mrf.mxu0
    %v1354 = vadd.f32 %v1305, %v1353
    %v1355 = vpop.f32.mrf.mxu0
    %v1356 = vadd.f32 %v1307, %v1355
    %1357 = vmatmul.bf16.gmra.mxu0 %v1019
    %v1358 = vpop.f32.mrf.mxu0
    %v1359 = vadd.f32 %v1310, %v1358
    %v1360 = vpop.f32.mrf.mxu0
    %v1361 = vadd.f32 %v1312, %v1360
    %1362 = vmatmul.bf16.gmra.mxu0 %v1020
    %v1363 = vpop.f32.mrf.mxu0
    %v1364 = vadd.f32 %v1315, %v1363
    %v1365 = vpop.f32.mrf.mxu0
    %v1366 = vadd.f32 %v1317, %v1365
    %1367 = vmatmul.bf16.gmra.mxu0 %v1021
    %v1368 = vpop.f32.mrf.mxu0
    %v1369 = vadd.f32 %v1320, %v1368
    %v1370 = vpop.f32.mrf.mxu0
    %v1371 = vadd.f32 %v1322, %v1370
    %1372 = vmatmul.bf16.gmra.mxu0 %v1022
    %v1373 = vpop.f32.mrf.mxu0
    %v1374 = vadd.f32 %v1325, %v1373
    %v1375 = vpop.f32.mrf.mxu0
    %v1376 = vadd.f32 %v1327, %v1375
    %1377 = vmatmul.bf16.gmra.mxu0 %v1023
    %v1378 = vpop.f32.mrf.mxu0
    %v1379 = vadd.f32 %v1330, %v1378
    %v1380 = vpop.f32.mrf.mxu0
    %v1381 = vadd.f32 %v1332, %v1380
    %1382 = vdwg.mxu0
    %1383 = vmatpush.bf16.msra.mxu0 %v553
    %1384 = vmatpush.bf16.msra.mxu0 %v552
    %1385 = vmatpush.bf16.msra.mxu0 %v551
    %1386 = vmatpush.bf16.msra.mxu0 %v550
    %1387 = vmatpush.bf16.msra.mxu0 %v549
    %1388 = vmatpush.bf16.msra.mxu0 %v548
    %1389 = vmatpush.bf16.msra.mxu0 %v547
    %1390 = vmatpush.bf16.msra.mxu0 %v546
    %1391 = vmatmul.bf16.gmra.mxu0 %v1032
    %v1392 = vpop.f32.mrf.mxu0
    %v1393 = vadd.f32 %v1344, %v1392
    %v1394 = vpop.f32.mrf.mxu0
    %v1395 = vadd.f32 %v1346, %v1394
    %1396 = vmatmul.bf16.gmra.mxu0 %v1033
    %v1397 = vpop.f32.mrf.mxu0
    %v1398 = vadd.f32 %v1349, %v1397
    %v1399 = vpop.f32.mrf.mxu0
    %v1400 = vadd.f32 %v1351, %v1399
    %1401 = vmatmul.bf16.gmra.mxu0 %v1034
    %v1402 = vpop.f32.mrf.mxu0
    %v1403 = vadd.f32 %v1354, %v1402
    %v1404 = vpop.f32.mrf.mxu0
    %v1405 = vadd.f32 %v1356, %v1404
    %1406 = vmatmul.bf16.gmra.mxu0 %v1035
    %v1407 = vpop.f32.mrf.mxu0
    %v1408 = vadd.f32 %v1359, %v1407
    %v1409 = vpop.f32.mrf.mxu0
    %v1410 = vadd.f32 %v1361, %v1409
    %1411 = vmatmul.bf16.gmra.mxu0 %v1036
    %v1412 = vpop.f32.mrf.mxu0
    %v1413 = vadd.f32 %v1364, %v1412
    %v1414 = vpop.f32.mrf.mxu0
    %v1415 = vadd.f32 %v1366, %v1414
    %1416 = vmatmul.bf16.gmra.mxu0 %v1037
    %v1417 = vpop.f32.mrf.mxu0
    %v1418 = vadd.f32 %v1369, %v1417
    %v1419 = vpop.f32.mrf.mxu0
    %v1420 = vadd.f32 %v1371, %v1419
    %1421 = vmatmul.bf16.gmra.mxu0 %v1038
    %v1422 = vpop.f32.mrf.mxu0
    %v1423 = vadd.f32 %v1374, %v1422
    %v1424 = vpop.f32.mrf.mxu0
    %v1425 = vadd.f32 %v1376, %v1424
    %1426 = vmatmul.bf16.gmra.mxu0 %v1039
    %v1427 = vpop.f32.mrf.mxu0
    %v1428 = vadd.f32 %v1379, %v1427
    %v1429 = vpop.f32.mrf.mxu0
    %v1430 = vadd.f32 %v1381, %v1429
    %1431 = vdwg.mxu0
    %v1432 = vadd.f32 %v896, %v1393
    %v1433 = vadd.f32 %v897, %v1395
    %v1434 = vadd.f32 %v898, %v1398
    %v1435 = vadd.f32 %v899, %v1400
    %v1436 = vadd.f32 %v900, %v1403
    %v1437 = vadd.f32 %v901, %v1405
    %v1438 = vadd.f32 %v902, %v1408
    %v1439 = vadd.f32 %v903, %v1410
    %v1440 = vadd.f32 %v904, %v1413
    %v1441 = vadd.f32 %v905, %v1415
    %v1442 = vadd.f32 %v906, %v1418
    %v1443 = vadd.f32 %v907, %v1420
    %v1444 = vadd.f32 %v908, %v1423
    %v1445 = vadd.f32 %v909, %v1425
    %v1446 = vadd.f32 %v910, %v1428
    %v1447 = vadd.f32 %v911, %v1430
    %1448 = vst [vmem:[#allocation5] sm:$0xff] %v1432
    %1449 = vst [vmem:[#allocation5 + $0x8] sm:$0xff] %v1433
    %1450 = vst [vmem:[#allocation5 + $0x10] sm:$0xff] %v1434
    %1451 = vst [vmem:[#allocation5 + $0x18] sm:$0xff] %v1435
    %1452 = vst [vmem:[#allocation5 + $0x20] sm:$0xff] %v1436
    %1453 = vst [vmem:[#allocation5 + $0x28] sm:$0xff] %v1437
    %1454 = vst [vmem:[#allocation5 + $0x30] sm:$0xff] %v1438
    %1455 = vst [vmem:[#allocation5 + $0x38] sm:$0xff] %v1439
    %1456 = vst [vmem:[#allocation5 + $0x40] sm:$0xff] %v1440
    %1457 = vst [vmem:[#allocation5 + $0x48] sm:$0xff] %v1441
    %1458 = vst [vmem:[#allocation5 + $0x50] sm:$0xff] %v1442
    %1459 = vst [vmem:[#allocation5 + $0x58] sm:$0xff] %v1443
    %1460 = vst [vmem:[#allocation5 + $0x60] sm:$0xff] %v1444
    %1461 = vst [vmem:[#allocation5 + $0x68] sm:$0xff] %v1445
    %1462 = vst [vmem:[#allocation5 + $0x70] sm:$0xff] %v1446
    %1463 = vst [vmem:[#allocation5 + $0x78] sm:$0xff] %v1447
    // Predicated region
    $region34: #{tpu_custom_call.1} parent=1 // pred_check
      %p1464 = pneg %p61
    $region35: #{tpu_custom_call.1} parent=1 // pred_check_branch
      %1466 = sbr.rel (%p1464) target = $region37
    $region36: #{tpu_custom_call.1} parent=1 // pred_region
      %v1467 = vld [vmem:[%s3] sm:$0x1]
      %v1468 = vld [vmem:[#allocation2] sm:$0x3]
      %v1470 = vperm.slane %v1467, 0
      %v1472 = vadd.f32 %v1468, %v1470
      %v1473 = vsel %vm875, %v1472, -inf
      %1474 = vmax.xlane.f32.xlu0 %v1473
      %v1475 = vpop.xlane.xlu0 %1474
      %v1476 = vsub.f32 %v1472, %v1475
      %v1477 = vmul.f32 %v1476, 1.442695
      %v1478 = vpow.pop %v1477
      %v1479 = vsel %vm875, %v1478, 0.0
      %1480 = vadd.xlane.f32.xlu0 %v1479
      %v1481 = vpop.xlane.xlu0 %1480
      %v1482 = vlog2.pop %v1481
      %v1483 = vmul.f32 %v1482, 0.6931472
      %v1484 = vsub.f32 %v1476, %v1483
      %v1485 = vmul.f32 %v1484, 1.442695
      %v1486 = vpow.pop %v1485
      %v1487 = vld [vmem:[#allocation5] sm:$0xff]
      %v1488 = vld [vmem:[#allocation5 + $0x8] sm:$0xff]
      %v1489 = vld [vmem:[#allocation5 + $0x10] sm:$0xff]
      %v1490 = vld [vmem:[#allocation5 + $0x18] sm:$0xff]
      %v1491 = vld [vmem:[#allocation5 + $0x20] sm:$0xff]
      %v1492 = vld [vmem:[#allocation5 + $0x28] sm:$0xff]
      %v1493 = vld [vmem:[#allocation5 + $0x30] sm:$0xff]
      %v1494 = vld [vmem:[#allocation5 + $0x38] sm:$0xff]
      %v1495 = vld [vmem:[#allocation5 + $0x40] sm:$0xff]
      %v1496 = vld [vmem:[#allocation5 + $0x48] sm:$0xff]
      %v1497 = vld [vmem:[#allocation5 + $0x50] sm:$0xff]
      %v1498 = vld [vmem:[#allocation5 + $0x58] sm:$0xff]
      %v1499 = vld [vmem:[#allocation5 + $0x60] sm:$0xff]
      %v1500 = vld [vmem:[#allocation5 + $0x68] sm:$0xff]
      %v1501 = vld [vmem:[#allocation5 + $0x70] sm:$0xff]
      %v1502 = vld [vmem:[#allocation5 + $0x78] sm:$0xff]
      %v1503 = vld [vmem:[#allocation3] sm:$0x3]
      %v1504 = vld [vmem:[#allocation4] sm:$0x3]
      %v1505 = vmax.f32 %v1504, 0.0
      %v1506 = vrsqrt.pop %v1505
      %v1507 = vmul.f32 %v1506, %v1505
      %v1508 = vmul.f32 %v1507, %v1506
      %v1509 = vmul.f32 0.5, %v1508
      %v1510 = vsub.f32 1.5, %v1509
      %v1511 = vmul.f32 %v1506, %v1510
      %v1512 = vmul.f32 %v1505, %v1511
      %vm1513 = vcmp.eq.f32.partialorder %v1505, inf
      %v1514 = vsel %vm1513, %v1505, %v1512
      %vm1515 = vcmp.eq.f32.partialorder %v1505, 0.0
      %v1516 = vand.u32 %v1505, 2147483648
      %v1517 = vsel %vm1515, %v1516, %v1514
      %v1518 = vadd.f32 %v1517, 1e-10
      %v1519 = vrcp.pop %v1518
      %v1520 = vmul.f32 %v1518, %v1519
      %v1521 = vsub.f32 1.0, %v1520
      %v1522 = vmul.f32 %v1519, %v1521
      %v1523 = vadd.f32 %v1519, %v1522
      %vm1524 = vweird.f32 %v1518
      %vm1525 = vweird.f32 %v1519
      %vm1526 = vmor %vm1524, %vm1525
      %v1527 = vsel %vm1526, %v1519, %v1523
      %v1528 = vand.u32 2147483647, %v1518
      %vm1529 = vcmp.eq.f32.partialorder %v1528, 8.507059e+37
      %v1530 = vand.u32 %v1518, 2147483648
      %v1531 = vor.u32 1.1754944e-38, %v1530
      %v1532 = vsel %vm1529, %v1531, %v1527
      %v1533 = vmul.f32 10.0, %v1532
      %1535 = vset.pattern.permute.xlu0 0
      %1536 = vperm.xlu0 %1535, %v1533
      %v1537 = vpop.permute.xlu0 %1536
      %v1539 = vmul.f32 %v1537, %v1503
      %v1540 = vadd.f32 %v1472, %v1539
      %v1541 = vsel %vm875, %v1540, -inf
      %1542 = vmax.xlane.f32.xlu0 %v1541
      %v1543 = vpop.xlane.xlu0 %1542
      %v1544 = vsub.f32 %v1540, %v1543
      %v1545 = vmul.f32 %v1544, 1.442695
      %v1546 = vpow.pop %v1545
      %v1547 = vsel %vm875, %v1546, 0.0
      %1548 = vadd.xlane.f32.xlu0 %v1547
      %v1549 = vpop.xlane.xlu0 %1548
      %v1550 = vrcp.pop %v1549
      %v1551 = vmul.f32 %v1549, %v1550
      %v1552 = vsub.f32 1.0, %v1551
      %v1553 = vmul.f32 %v1550, %v1552
      %v1554 = vadd.f32 %v1550, %v1553
      %vm1555 = vweird.f32 %v1549
      %vm1556 = vweird.f32 %v1550
      %vm1557 = vmor %vm1555, %vm1556
      %v1558 = vsel %vm1557, %v1550, %v1554
      %v1559 = vand.u32 2147483647, %v1549
      %vm1560 = vcmp.eq.f32.partialorder %v1559, 8.507059e+37
      %v1561 = vand.u32 %v1549, 2147483648
      %v1562 = vor.u32 1.1754944e-38, %v1561
      %v1563 = vsel %vm1560, %v1562, %v1558
      %v1564 = vmul.f32 %v1546, %v1563
      %v1565 = vsub.f32 %v1564, %v1486
      %1566 = vmatpush.msra.mxu0 %v1502
      %1567 = vmatpush.msra.mxu0 %v1501
      %1568 = vmatpush.msra.mxu0 %v1500
      %1569 = vmatpush.msra.mxu0 %v1499
      %1570 = vmatpush.msra.mxu0 %v1498
      %1571 = vmatpush.msra.mxu0 %v1497
      %1572 = vmatpush.msra.mxu0 %v1496
      %1573 = vmatpush.msra.mxu0 %v1495
      %1574 = vmatpush.msra.mxu0 %v1494
      %1575 = vmatpush.msra.mxu0 %v1493
      %1576 = vmatpush.msra.mxu0 %v1492
      %1577 = vmatpush.msra.mxu0 %v1491
      %1578 = vmatpush.msra.mxu0 %v1490
      %1579 = vmatpush.msra.mxu0 %v1489
      %1580 = vmatpush.msra.mxu0 %v1488
      %1581 = vmatpush.msra.mxu0 %v1487
      %1582 = vmatmul.f32.gmra.mxu0 %v1565
      %v1583 = vpop.f32.mrf.mxu0
      %v1584 = vadd.f32 0.0, %v1583
      %1585 = vdwg.mxu0
      %v1586 = vmul.f32 %v1584, %v1565
      %v1587 = vsel %vm875, %v1586, 0.0
      %1588 = vadd.xlane.f32.xlu0 %v1587
      %v1589 = vpop.xlane.xlu0 %1588
      %v1590 = vmax.f32 %v1589, 0.0
      %v1591 = vrsqrt.pop %v1590
      %v1592 = vmul.f32 %v1591, %v1590
      %v1593 = vmul.f32 %v1592, %v1591
      %v1594 = vmul.f32 0.5, %v1593
      %v1595 = vsub.f32 1.5, %v1594
      %v1596 = vmul.f32 %v1591, %v1595
      %v1597 = vmul.f32 %v1590, %v1596
      %vm1598 = vcmp.eq.f32.partialorder %v1590, inf
      %v1599 = vsel %vm1598, %v1590, %v1597
      %vm1600 = vcmp.eq.f32.partialorder %v1590, 0.0
      %v1601 = vand.u32 %v1590, 2147483648
      %v1602 = vsel %vm1600, %v1601, %v1599
      %v1603 = vadd.f32 %v1602, 1e-10
      %v1604 = vrcp.pop %v1603
      %v1605 = vmul.f32 %v1603, %v1604
      %v1606 = vsub.f32 1.0, %v1605
      %v1607 = vmul.f32 %v1604, %v1606
      %v1608 = vadd.f32 %v1604, %v1607
      %vm1609 = vweird.f32 %v1603
      %vm1610 = vweird.f32 %v1604
      %vm1611 = vmor %vm1609, %vm1610
      %v1612 = vsel %vm1611, %v1604, %v1608
      %v1613 = vand.u32 2147483647, %v1603
      %vm1614 = vcmp.eq.f32.partialorder %v1613, 8.507059e+37
      %v1615 = vand.u32 %v1603, 2147483648
      %v1616 = vor.u32 1.1754944e-38, %v1615
      %v1617 = vsel %vm1614, %v1616, %v1612
      %v1618 = vmul.f32 1.0, %v1617
      %v1619 = vmul.f32 %v1618, %v1584
      %v1620 = vadd.f32 %v1472, %v1619
      %v1621 = vsel %vm875, %v1620, -inf
      %1622 = vmax.xlane.f32.xlu0 %v1621
      %v1623 = vpop.xlane.xlu0 %1622
      %v1624 = vsub.f32 %v1620, %v1623
      %v1625 = vmul.f32 %v1624, 1.442695
      %v1626 = vpow.pop %v1625
      %v1627 = vsel %vm875, %v1626, 0.0
      %1628 = vadd.xlane.f32.xlu0 %v1627
      %v1629 = vpop.xlane.xlu0 %1628
      %v1630 = vlog2.pop %v1629
      %v1631 = vmul.f32 %v1630, 0.6931472
      %v1632 = vsub.f32 %v1624, %v1631
      %v1633 = vsub.f32 %v1484, %v1632
      %v1634 = vmul.f32 %v1486, %v1633
      %v1635 = vsel %vm875, %v1634, 0.0
      %v1636 = vrot.slane %v1635, 4
      %v1637 = vadd.f32 %v1635, %v1636
      %v1638 = vrot.slane %v1637, 2
      %v1639 = vadd.f32 %v1637, %v1638
      %v1640 = vrot.slane %v1639, 1
      %v1641 = vadd.f32 %v1639, %v1640
      %1642 = vst [vmem:[#allocation12] sm:$0x1] %v1641
    $region37: #{tpu_custom_call.1} parent=1 // pred_fallthru
      _
    // Predicated region
    $region38: #{tpu_custom_call.1} parent=1 // pred_check
      _
    $region39: #{tpu_custom_call.1} parent=1 // pred_check_branch
      %1644 = sbr.rel (0) target = $region41
    $region40: #{tpu_custom_call.1} parent=1 // pred_region
      %1646 = vsyncadd [#allocation8], 0
      %s1648 = sshll.u32 [#allocation12], 4
      %s1649 = int_to_ptr.vmem [resolvable:$true] %s1648
      %s1650 = sshll.u32 %s4, 4
      %s1651 = int_to_ptr.hbm [resolvable:$true] %s1650
      %1653 = dma.vmem_to_hbm [thread:$0]  %s1649, 16, %s1651, [#allocation8]
    $region41: #{tpu_custom_call.1} parent=1 // pred_fallthru
      _
    // Predicated region
    $region42: #{tpu_custom_call.1} parent=1 // pred_check
      _
    $region43: #{tpu_custom_call.1} parent=1 // pred_check_branch
      %1655 = sbr.rel (0) target = $region45
    $region44: #{tpu_custom_call.1} parent=1 // pred_region
      %1657 = dma.done [#allocation8], 16
    $region45: #{tpu_custom_call.1} parent=1 // pred_fallthru
      _
    %1658 = vsyncpa [#allocation7], 1
    %1659 = vsyncpa [#allocation10], 1
    %1660 = vsyncpa [#allocation8], 1

</llo_original>
